<compile_context>
chip_gen: v7x
topology: tpu7x:2x2x1
jax: 0.10.0
libtpu: 0.0.40
codegen_flags: <defaults>
</compile_context>

<pallas_src>
import math
import functools

import jax
import jax.numpy as jnp
from jax import lax
from jax.experimental import pallas as pl
from jax.experimental.pallas import tpu as pltpu


# ---------------------------------------------------------------------------
# In-kernel math helpers (VPU/EUP ops only)
# ---------------------------------------------------------------------------
def _poly(z, coeffs):
    p = jnp.full_like(z, coeffs[0])
    for c in coeffs[1:]:
        p = p * z + c
    return p


def _erf(x):
    # Rational approximation used by XLA for f32 erf (Cephes-derived).
    # Input clipped to [-4, 4]; erf tail error there is ~1e-8 (acceptable).
    alpha = (0.00022905065861350646, 0.0034082910107109506, 0.050955695062380861,
             0.18520832239976145, 1.128379143519084)
    beta = (-1.1791602954361697e-07, 2.3547966471313185e-05, 0.0010179625278914885,
            0.014070470171167667, 0.11098505178285362, 0.49746925110067538, 1.0)
    xc = jnp.clip(x, -4.0, 4.0)
    z = xc * xc
    # Keep exact division here for nn.GELU(approximate='none') parity.
    return xc * _poly(z, alpha) / _poly(z, beta)


def _gelu_exact(x):
    return 0.5 * x * (1.0 + _erf(x * (1.0 / math.sqrt(2.0))))


def _layernorm(x, w, b, eps):
    mu = jnp.mean(x, axis=-1, keepdims=True)
    xc = x - mu
    var = jnp.mean(xc * xc, axis=-1, keepdims=True)
    inv = lax.rsqrt(var + eps)
    return xc * inv * w + b


# ---------------------------------------------------------------------------
# Pallas kernel: one ViT encoder block for one batch element
# ---------------------------------------------------------------------------
def block_kernel(x_ref,
                 n1w_ref, n1b_ref,
                 wq_ref, wk_ref, wv_ref,          # (C, C) bf16 each (scale folded into wq)
                 bq_ref, bk_ref, bv_ref,          # (1, C) f32 each (scale folded into bq)
                 wproj_ref, bproj_ref,            # (H, hd, C) bf16, (1, C) f32
                 n2w_ref, n2b_ref,
                 wfc1_ref, bfc1_ref,              # (C, Hm) bf16, (1, Hm) f32
                 wfc2_ref, bfc2_ref,              # (Hm, C) bf16, (1, C) f32
                 o_ref,
                 *, num_heads, eps):
    x = x_ref[0]                                  # (N, C) f32
    n, c = x.shape
    hd = c // num_heads

    # ---- attention branch: x + proj(softmax(q k^T / sqrt(d)) v) ----
    xn = _layernorm(x, n1w_ref[0], n1b_ref[0], eps)      # f32 statistics
    xnb = xn.astype(jnp.bfloat16)

    # Three lane-dense (N, C) projections, bf16 MXU with f32 accumulation.
    q = jnp.dot(xnb, wq_ref[...], preferred_element_type=jnp.float32) + bq_ref[0]
    k = jnp.dot(xnb, wk_ref[...], preferred_element_type=jnp.float32) + bk_ref[0]
    v = jnp.dot(xnb, wv_ref[...], preferred_element_type=jnp.float32) + bv_ref[0]
    qb = q.astype(jnp.bfloat16)
    kb = k.astype(jnp.bfloat16)
    vb = v.astype(jnp.bfloat16)

    # Static unrolled head loop: back-to-back MXU dots; concat removed by
    # accumulating each head's (N, hd) output against its (hd, C) proj slice.
    attn_acc = jnp.zeros((n, c), jnp.float32)
    for h in range(num_heads):
        sl = slice(h * hd, (h + 1) * hd)
        s = lax.dot_general(qb[:, sl], kb[:, sl], (((1,), (1,)), ((), ())),
                            preferred_element_type=jnp.float32)        # (N, N)
        s = s - jnp.max(s, axis=-1, keepdims=True)                      # f32 softmax
        p = jnp.exp(s)
        p = p * pl.reciprocal(jnp.sum(p, axis=-1, keepdims=True), approx=True)
        oh = jnp.dot(p.astype(jnp.bfloat16), vb[:, sl],
                     preferred_element_type=jnp.float32)                # (N, hd)
        attn_acc = attn_acc + jnp.dot(oh.astype(jnp.bfloat16), wproj_ref[h],
                                      preferred_element_type=jnp.float32)

    x = x + attn_acc + bproj_ref[0]

    # ---- mlp branch: x + fc2(gelu(fc1(norm2(x)))) ----
    xn2 = _layernorm(x, n2w_ref[0], n2b_ref[0], eps)
    hmid = jnp.dot(xn2.astype(jnp.bfloat16), wfc1_ref[...],
                   preferred_element_type=jnp.float32) + bfc1_ref[0]
    hmid = _gelu_exact(hmid)
    y2 = jnp.dot(hmid.astype(jnp.bfloat16), wfc2_ref[...],
                 preferred_element_type=jnp.float32) + bfc2_ref[0]

    o_ref[0] = (x + y2).astype(o_ref.dtype)


# ---------------------------------------------------------------------------
# Wrapper
# ---------------------------------------------------------------------------
_PARAM_ORDER = ("n1w", "n1b", "wq", "wk", "wv", "bq", "bk", "bv",
                "wproj", "bproj", "n2w", "n2b", "wfc1", "bfc1", "wfc2", "bfc2")


def vit_block(x, params, num_heads, eps=1e-6):
    B, N, C = x.shape
    assert C % num_heads == 0, "dim must be divisible by num_heads"
    Hm = params["wfc1"].shape[1]                  # MLP hidden dim
    weights = [params[k] for k in _PARAM_ORDER]

    # Weights resident once in VMEM for the whole grid (no double-buffering).
    resident_specs = [pl.BlockSpec(memory_space=pltpu.MemorySpace.VMEM)
                      for _ in weights]

    # Explicit VMEM budget: resident weights + double-buffered x/out blocks
    # + rough f32 activation live set, 2x headroom, capped below v7x physical.
    param_bytes = sum(int(w.size) * w.dtype.itemsize for w in weights)
    io_bytes = 2 * 2 * N * C * x.dtype.itemsize
    act_bytes = 4 * (10 * N * C + 2 * N * N + 2 * N * Hm)
    vmem_limit = int(min(max(2 * (param_bytes + io_bytes + act_bytes),
                             16 * 1024 * 1024),
                         48 * 1024 * 1024))

    kernel = functools.partial(block_kernel, num_heads=num_heads, eps=eps)

    return pl.pallas_call(
        kernel,
        out_shape=jax.ShapeDtypeStruct((B, N, C), x.dtype),
        grid=(B,),
        in_specs=[pl.BlockSpec((1, N, C), lambda b: (b, 0, 0))] + resident_specs,
        out_specs=pl.BlockSpec((1, N, C), lambda b: (b, 0, 0)),
        compiler_params=pltpu.CompilerParams(
            dimension_semantics=("parallel",),     # batch elems are independent
            vmem_limit_bytes=vmem_limit),
    )(x, *weights)


def init_params(key, dim, num_heads, mlp_ratio=4.0, weight_dtype=jnp.bfloat16):
    """Build kernel-ready parameters from PyTorch-layout (out, in) weights."""
    hidden = int(dim * mlp_ratio)
    hd = dim // num_heads
    scale = hd ** (-0.5)
    ks = jax.random.split(key, 8)
    std = 0.02

    wqkv = jax.random.normal(ks[0], (3 * dim, dim), jnp.float32) * std
    bqkv = jax.random.normal(ks[1], (3 * dim,), jnp.float32) * std
    wproj = jax.random.normal(ks[2], (dim, dim), jnp.float32) * std
    bproj = jax.random.normal(ks[3], (dim,), jnp.float32) * std
    wfc1 = jax.random.normal(ks[4], (hidden, dim), jnp.float32) * std
    bfc1 = jax.random.normal(ks[5], (hidden,), jnp.float32) * std
    wfc2 = jax.random.normal(ks[6], (dim, hidden), jnp.float32) * std
    bfc2 = jax.random.normal(ks[7], (dim,), jnp.float32) * std

    wq, wk, wv = wqkv[:dim], wqkv[dim:2 * dim], wqkv[2 * dim:]
    bq, bk, bv = bqkv[:dim], bqkv[dim:2 * dim], bqkv[2 * dim:]

    return {
        "n1w": jnp.ones((1, dim), jnp.float32),
        "n1b": jnp.zeros((1, dim), jnp.float32),
        # Pre-transposed to (in, out); attention scale folded into q weight/bias.
        "wq": (wq.T * scale).astype(weight_dtype),
        "wk": wk.T.astype(weight_dtype),
        "wv": wv.T.astype(weight_dtype),
        "bq": (bq * scale).reshape(1, dim),
        "bk": bk.reshape(1, dim),
        "bv": bv.reshape(1, dim),
        # proj weight (C_in, C_out) split per head -> (H, hd, C_out).
        "wproj": wproj.T.reshape(num_heads, hd, dim).astype(weight_dtype),
        "bproj": bproj.reshape(1, dim),
        "n2w": jnp.ones((1, dim), jnp.float32),
        "n2b": jnp.zeros((1, dim), jnp.float32),
        "wfc1": wfc1.T.astype(weight_dtype),       # (C, Hm)
        "bfc1": bfc1.reshape(1, hidden),
        "wfc2": wfc2.T.astype(weight_dtype),       # (Hm, C)
        "bfc2": bfc2.reshape(1, dim),
    }


if __name__ == "__main__":
    B, N, C = 2, 8, 32
    num_heads = 4

    key = jax.random.PRNGKey(0)
    kx, kp = jax.random.split(key)
    x = jax.random.normal(kx, (B, N, C), jnp.float32)
    params = init_params(kp, C, num_heads, mlp_ratio=4.0)

    out = vit_block(x, params, num_heads)
    out = jax.block_until_ready(out)
    assert out.shape == (B, N, C) and out.dtype == jnp.float32
    assert bool(jnp.all(jnp.isfinite(out)))
    print("KERNEL_OK")
</pallas_src>

<mosaic_0001>
module attributes {stable_mosaic.version = 11 : i64} {
  func.func @block_kernel(%arg0: i32, %arg1: memref<1x8x32xf32, #tpu.memory_space<vmem>>, %arg2: memref<1x32xf32, #tpu.memory_space<vmem>>, %arg3: memref<1x32xf32, #tpu.memory_space<vmem>>, %arg4: memref<32x32xbf16, #tpu.memory_space<vmem>>, %arg5: memref<32x32xbf16, #tpu.memory_space<vmem>>, %arg6: memref<32x32xbf16, #tpu.memory_space<vmem>>, %arg7: memref<1x32xf32, #tpu.memory_space<vmem>>, %arg8: memref<1x32xf32, #tpu.memory_space<vmem>>, %arg9: memref<1x32xf32, #tpu.memory_space<vmem>>, %arg10: memref<4x8x32xbf16, #tpu.memory_space<vmem>>, %arg11: memref<1x32xf32, #tpu.memory_space<vmem>>, %arg12: memref<1x32xf32, #tpu.memory_space<vmem>>, %arg13: memref<1x32xf32, #tpu.memory_space<vmem>>, %arg14: memref<32x128xbf16, #tpu.memory_space<vmem>>, %arg15: memref<1x128xf32, #tpu.memory_space<vmem>>, %arg16: memref<128x32xbf16, #tpu.memory_space<vmem>>, %arg17: memref<1x32xf32, #tpu.memory_space<vmem>>, %arg18: memref<1x8x32xf32, #tpu.memory_space<vmem>>) attributes {dimension_semantics = [#tpu.dimension_semantics<parallel>], iteration_bounds = array<i64: 2>, scalar_prefetch = 0 : i64, scratch_operands = 0 : i64, tpu.core_type = #tpu.core_type<tc>, window_params = [{transform_indices = @transform_0, window_bounds = array<i64: 1, 8, 32>}, {pipeline_mode = #tpu.pipeline_mode<synchronous>, transform_indices = @transform_1, window_bounds = array<i64: 1, 32>}, {pipeline_mode = #tpu.pipeline_mode<synchronous>, transform_indices = @transform_2, window_bounds = array<i64: 1, 32>}, {pipeline_mode = #tpu.pipeline_mode<synchronous>, transform_indices = @transform_3, window_bounds = array<i64: 32, 32>}, {pipeline_mode = #tpu.pipeline_mode<synchronous>, transform_indices = @transform_4, window_bounds = array<i64: 32, 32>}, {pipeline_mode = #tpu.pipeline_mode<synchronous>, transform_indices = @transform_5, window_bounds = array<i64: 32, 32>}, {pipeline_mode = #tpu.pipeline_mode<synchronous>, transform_indices = @transform_6, window_bounds = array<i64: 1, 32>}, {pipeline_mode = #tpu.pipeline_mode<synchronous>, transform_indices = @transform_7, window_bounds = array<i64: 1, 32>}, {pipeline_mode = #tpu.pipeline_mode<synchronous>, transform_indices = @transform_8, window_bounds = array<i64: 1, 32>}, {pipeline_mode = #tpu.pipeline_mode<synchronous>, transform_indices = @transform_9, window_bounds = array<i64: 4, 8, 32>}, {pipeline_mode = #tpu.pipeline_mode<synchronous>, transform_indices = @transform_10, window_bounds = array<i64: 1, 32>}, {pipeline_mode = #tpu.pipeline_mode<synchronous>, transform_indices = @transform_11, window_bounds = array<i64: 1, 32>}, {pipeline_mode = #tpu.pipeline_mode<synchronous>, transform_indices = @transform_12, window_bounds = array<i64: 1, 32>}, {pipeline_mode = #tpu.pipeline_mode<synchronous>, transform_indices = @transform_13, window_bounds = array<i64: 32, 128>}, {pipeline_mode = #tpu.pipeline_mode<synchronous>, transform_indices = @transform_14, window_bounds = array<i64: 1, 128>}, {pipeline_mode = #tpu.pipeline_mode<synchronous>, transform_indices = @transform_15, window_bounds = array<i64: 128, 32>}, {pipeline_mode = #tpu.pipeline_mode<synchronous>, transform_indices = @transform_16, window_bounds = array<i64: 1, 32>}, {transform_indices = @transform_17, window_bounds = array<i64: 1, 8, 32>}]} {
    %c0 = arith.constant 0 : index
    %c0_0 = arith.constant 0 : index
    %c0_1 = arith.constant 0 : index
    %0 = vector.load %arg1[%c0, %c0_0, %c0_1] : memref<1x8x32xf32, #tpu.memory_space<vmem>>, vector<1x8x32xf32>
    %1 = vector.shape_cast %0 : vector<1x8x32xf32> to vector<8x32xf32>
    %c0_2 = arith.constant 0 : index
    %c0_3 = arith.constant 0 : index
    %2 = vector.load %arg2[%c0_2, %c0_3] : memref<1x32xf32, #tpu.memory_space<vmem>>, vector<1x32xf32>
    %3 = vector.shape_cast %2 : vector<1x32xf32> to vector<32xf32>
    %c0_4 = arith.constant 0 : index
    %c0_5 = arith.constant 0 : index
    %4 = vector.load %arg3[%c0_4, %c0_5] : memref<1x32xf32, #tpu.memory_space<vmem>>, vector<1x32xf32>
    %5 = vector.shape_cast %4 : vector<1x32xf32> to vector<32xf32>
    %cst = arith.constant dense<0.000000e+00> : vector<8xf32>
    %6 = vector.multi_reduction <add>, %1, %cst [1] : vector<8x32xf32> to vector<8xf32>
    %7 = vector.shape_cast %6 : vector<8xf32> to vector<8x1xf32>
    %cst_6 = arith.constant 3.200000e+01 : f32
    %8 = vector.broadcast %cst_6 : f32 to vector<8x1xf32>
    %9 = arith.divf %7, %8 : vector<8x1xf32>
    %10 = vector.broadcast %9 : vector<8x1xf32> to vector<8x32xf32>
    %11 = arith.subf %1, %10 : vector<8x32xf32>
    %12 = arith.mulf %11, %11 : vector<8x32xf32>
    %cst_7 = arith.constant dense<0.000000e+00> : vector<8xf32>
    %13 = vector.multi_reduction <add>, %12, %cst_7 [1] : vector<8x32xf32> to vector<8xf32>
    %14 = vector.shape_cast %13 : vector<8xf32> to vector<8x1xf32>
    %cst_8 = arith.constant 3.200000e+01 : f32
    %15 = vector.broadcast %cst_8 : f32 to vector<8x1xf32>
    %16 = arith.divf %14, %15 : vector<8x1xf32>
    %cst_9 = arith.constant 9.99999997E-7 : f32
    %17 = vector.broadcast %cst_9 : f32 to vector<8x1xf32>
    %18 = arith.addf %16, %17 : vector<8x1xf32>
    %19 = math.rsqrt %18 : vector<8x1xf32>
    %20 = vector.broadcast %19 : vector<8x1xf32> to vector<8x32xf32>
    %21 = arith.mulf %11, %20 : vector<8x32xf32>
    %22 = vector.shape_cast %3 : vector<32xf32> to vector<1x32xf32>
    %23 = vector.broadcast %22 : vector<1x32xf32> to vector<8x32xf32>
    %24 = arith.mulf %21, %23 : vector<8x32xf32>
    %25 = vector.shape_cast %5 : vector<32xf32> to vector<1x32xf32>
    %26 = vector.broadcast %25 : vector<1x32xf32> to vector<8x32xf32>
    %27 = arith.addf %24, %26 : vector<8x32xf32>
    %28 = arith.truncf %27 : vector<8x32xf32> to vector<8x32xbf16>
    %c0_10 = arith.constant 0 : index
    %c0_11 = arith.constant 0 : index
    %29 = vector.load %arg4[%c0_10, %c0_11] : memref<32x32xbf16, #tpu.memory_space<vmem>>, vector<32x32xbf16>
    %cst_12 = arith.constant dense<0.000000e+00> : vector<8x32xf32>
    %30 = tpu.matmul %28, %29, %cst_12 {dimension_numbers = #tpu.dot_dimension_numbers<[1], [0], [0], [1], [0, 0, 1, 1], [], []>} : vector<8x32xbf16>, vector<32x32xbf16>, vector<8x32xf32> -> vector<8x32xf32>
    %c0_13 = arith.constant 0 : index
    %c0_14 = arith.constant 0 : index
    %31 = vector.load %arg7[%c0_13, %c0_14] : memref<1x32xf32, #tpu.memory_space<vmem>>, vector<1x32xf32>
    %32 = vector.shape_cast %31 : vector<1x32xf32> to vector<32xf32>
    %33 = vector.shape_cast %32 : vector<32xf32> to vector<1x32xf32>
    %34 = vector.broadcast %33 : vector<1x32xf32> to vector<8x32xf32>
    %35 = arith.addf %30, %34 : vector<8x32xf32>
    %c0_15 = arith.constant 0 : index
    %c0_16 = arith.constant 0 : index
    %36 = vector.load %arg5[%c0_15, %c0_16] : memref<32x32xbf16, #tpu.memory_space<vmem>>, vector<32x32xbf16>
    %cst_17 = arith.constant dense<0.000000e+00> : vector<8x32xf32>
    %37 = tpu.matmul %28, %36, %cst_17 {dimension_numbers = #tpu.dot_dimension_numbers<[1], [0], [0], [1], [0, 0, 1, 1], [], []>} : vector<8x32xbf16>, vector<32x32xbf16>, vector<8x32xf32> -> vector<8x32xf32>
    %c0_18 = arith.constant 0 : index
    %c0_19 = arith.constant 0 : index
    %38 = vector.load %arg8[%c0_18, %c0_19] : memref<1x32xf32, #tpu.memory_space<vmem>>, vector<1x32xf32>
    %39 = vector.shape_cast %38 : vector<1x32xf32> to vector<32xf32>
    %40 = vector.shape_cast %39 : vector<32xf32> to vector<1x32xf32>
    %41 = vector.broadcast %40 : vector<1x32xf32> to vector<8x32xf32>
    %42 = arith.addf %37, %41 : vector<8x32xf32>
    %c0_20 = arith.constant 0 : index
    %c0_21 = arith.constant 0 : index
    %43 = vector.load %arg6[%c0_20, %c0_21] : memref<32x32xbf16, #tpu.memory_space<vmem>>, vector<32x32xbf16>
    %cst_22 = arith.constant dense<0.000000e+00> : vector<8x32xf32>
    %44 = tpu.matmul %28, %43, %cst_22 {dimension_numbers = #tpu.dot_dimension_numbers<[1], [0], [0], [1], [0, 0, 1, 1], [], []>} : vector<8x32xbf16>, vector<32x32xbf16>, vector<8x32xf32> -> vector<8x32xf32>
    %c0_23 = arith.constant 0 : index
    %c0_24 = arith.constant 0 : index
    %45 = vector.load %arg9[%c0_23, %c0_24] : memref<1x32xf32, #tpu.memory_space<vmem>>, vector<1x32xf32>
    %46 = vector.shape_cast %45 : vector<1x32xf32> to vector<32xf32>
    %47 = vector.shape_cast %46 : vector<32xf32> to vector<1x32xf32>
    %48 = vector.broadcast %47 : vector<1x32xf32> to vector<8x32xf32>
    %49 = arith.addf %44, %48 : vector<8x32xf32>
    %50 = arith.truncf %35 : vector<8x32xf32> to vector<8x32xbf16>
    %51 = arith.truncf %42 : vector<8x32xf32> to vector<8x32xbf16>
    %52 = arith.truncf %49 : vector<8x32xf32> to vector<8x32xbf16>
    %cst_25 = arith.constant 0.000000e+00 : f32
    %53 = vector.broadcast %cst_25 : f32 to vector<8x32xf32>
    %54 = vector.extract_strided_slice %50 {offsets = [0, 0], sizes = [8, 8], strides = [1, 1]} : vector<8x32xbf16> to vector<8x8xbf16>
    %55 = vector.extract_strided_slice %51 {offsets = [0, 0], sizes = [8, 8], strides = [1, 1]} : vector<8x32xbf16> to vector<8x8xbf16>
    %cst_26 = arith.constant dense<0.000000e+00> : vector<8x8xf32>
    %56 = tpu.matmul %54, %55, %cst_26 {dimension_numbers = #tpu.dot_dimension_numbers<[1], [1], [0], [0], [0, 0, 1, 0], [], []>} : vector<8x8xbf16>, vector<8x8xbf16>, vector<8x8xf32> -> vector<8x8xf32>
    %cst_27 = arith.constant dense<0xFF800000> : vector<8xf32>
    %57 = vector.multi_reduction <maximumf>, %56, %cst_27 [1] : vector<8x8xf32> to vector<8xf32>
    %58 = vector.shape_cast %57 : vector<8xf32> to vector<8x1xf32>
    %59 = vector.broadcast %58 : vector<8x1xf32> to vector<8x8xf32>
    %60 = arith.subf %56, %59 : vector<8x8xf32>
    %61 = math.exp %60 : vector<8x8xf32>
    %cst_28 = arith.constant dense<0.000000e+00> : vector<8xf32>
    %62 = vector.multi_reduction <add>, %61, %cst_28 [1] : vector<8x8xf32> to vector<8xf32>
    %63 = vector.shape_cast %62 : vector<8xf32> to vector<8x1xf32>
    %64 = tpu.reciprocal %63 {approx = true} : vector<8x1xf32> -> vector<8x1xf32>
    %65 = vector.broadcast %64 : vector<8x1xf32> to vector<8x8xf32>
    %66 = arith.mulf %61, %65 : vector<8x8xf32>
    %67 = arith.truncf %66 : vector<8x8xf32> to vector<8x8xbf16>
    %68 = vector.extract_strided_slice %52 {offsets = [0, 0], sizes = [8, 8], strides = [1, 1]} : vector<8x32xbf16> to vector<8x8xbf16>
    %cst_29 = arith.constant dense<0.000000e+00> : vector<8x8xf32>
    %69 = tpu.matmul %67, %68, %cst_29 {dimension_numbers = #tpu.dot_dimension_numbers<[1], [0], [0], [1], [0, 0, 1, 1], [], []>} : vector<8x8xbf16>, vector<8x8xbf16>, vector<8x8xf32> -> vector<8x8xf32>
    %70 = arith.truncf %69 : vector<8x8xf32> to vector<8x8xbf16>
    %c0_30 = arith.constant 0 : index
    %c0_31 = arith.constant 0 : index
    %c0_32 = arith.constant 0 : index
    %71 = vector.load %arg10[%c0_30, %c0_31, %c0_32] : memref<4x8x32xbf16, #tpu.memory_space<vmem>>, vector<1x8x32xbf16>
    %72 = vector.shape_cast %71 : vector<1x8x32xbf16> to vector<8x32xbf16>
    %cst_33 = arith.constant dense<0.000000e+00> : vector<8x32xf32>
    %73 = tpu.matmul %70, %72, %cst_33 {dimension_numbers = #tpu.dot_dimension_numbers<[1], [0], [0], [1], [0, 0, 1, 1], [], []>} : vector<8x8xbf16>, vector<8x32xbf16>, vector<8x32xf32> -> vector<8x32xf32>
    %74 = arith.addf %53, %73 : vector<8x32xf32>
    %75 = vector.extract_strided_slice %50 {offsets = [0, 8], sizes = [8, 8], strides = [1, 1]} : vector<8x32xbf16> to vector<8x8xbf16>
    %76 = vector.extract_strided_slice %51 {offsets = [0, 8], sizes = [8, 8], strides = [1, 1]} : vector<8x32xbf16> to vector<8x8xbf16>
    %cst_34 = arith.constant dense<0.000000e+00> : vector<8x8xf32>
    %77 = tpu.matmul %75, %76, %cst_34 {dimension_numbers = #tpu.dot_dimension_numbers<[1], [1], [0], [0], [0, 0, 1, 0], [], []>} : vector<8x8xbf16>, vector<8x8xbf16>, vector<8x8xf32> -> vector<8x8xf32>
    %cst_35 = arith.constant dense<0xFF800000> : vector<8xf32>
    %78 = vector.multi_reduction <maximumf>, %77, %cst_35 [1] : vector<8x8xf32> to vector<8xf32>
    %79 = vector.shape_cast %78 : vector<8xf32> to vector<8x1xf32>
    %80 = vector.broadcast %79 : vector<8x1xf32> to vector<8x8xf32>
    %81 = arith.subf %77, %80 : vector<8x8xf32>
    %82 = math.exp %81 : vector<8x8xf32>
    %cst_36 = arith.constant dense<0.000000e+00> : vector<8xf32>
    %83 = vector.multi_reduction <add>, %82, %cst_36 [1] : vector<8x8xf32> to vector<8xf32>
    %84 = vector.shape_cast %83 : vector<8xf32> to vector<8x1xf32>
    %85 = tpu.reciprocal %84 {approx = true} : vector<8x1xf32> -> vector<8x1xf32>
    %86 = vector.broadcast %85 : vector<8x1xf32> to vector<8x8xf32>
    %87 = arith.mulf %82, %86 : vector<8x8xf32>
    %88 = arith.truncf %87 : vector<8x8xf32> to vector<8x8xbf16>
    %89 = vector.extract_strided_slice %52 {offsets = [0, 8], sizes = [8, 8], strides = [1, 1]} : vector<8x32xbf16> to vector<8x8xbf16>
    %cst_37 = arith.constant dense<0.000000e+00> : vector<8x8xf32>
    %90 = tpu.matmul %88, %89, %cst_37 {dimension_numbers = #tpu.dot_dimension_numbers<[1], [0], [0], [1], [0, 0, 1, 1], [], []>} : vector<8x8xbf16>, vector<8x8xbf16>, vector<8x8xf32> -> vector<8x8xf32>
    %91 = arith.truncf %90 : vector<8x8xf32> to vector<8x8xbf16>
    %c1 = arith.constant 1 : index
    %c0_38 = arith.constant 0 : index
    %c0_39 = arith.constant 0 : index
    %92 = vector.load %arg10[%c1, %c0_38, %c0_39] : memref<4x8x32xbf16, #tpu.memory_space<vmem>>, vector<1x8x32xbf16>
    %93 = vector.shape_cast %92 : vector<1x8x32xbf16> to vector<8x32xbf16>
    %cst_40 = arith.constant dense<0.000000e+00> : vector<8x32xf32>
    %94 = tpu.matmul %91, %93, %cst_40 {dimension_numbers = #tpu.dot_dimension_numbers<[1], [0], [0], [1], [0, 0, 1, 1], [], []>} : vector<8x8xbf16>, vector<8x32xbf16>, vector<8x32xf32> -> vector<8x32xf32>
    %95 = arith.addf %74, %94 : vector<8x32xf32>
    %96 = vector.extract_strided_slice %50 {offsets = [0, 16], sizes = [8, 8], strides = [1, 1]} : vector<8x32xbf16> to vector<8x8xbf16>
    %97 = vector.extract_strided_slice %51 {offsets = [0, 16], sizes = [8, 8], strides = [1, 1]} : vector<8x32xbf16> to vector<8x8xbf16>
    %cst_41 = arith.constant dense<0.000000e+00> : vector<8x8xf32>
    %98 = tpu.matmul %96, %97, %cst_41 {dimension_numbers = #tpu.dot_dimension_numbers<[1], [1], [0], [0], [0, 0, 1, 0], [], []>} : vector<8x8xbf16>, vector<8x8xbf16>, vector<8x8xf32> -> vector<8x8xf32>
    %cst_42 = arith.constant dense<0xFF800000> : vector<8xf32>
    %99 = vector.multi_reduction <maximumf>, %98, %cst_42 [1] : vector<8x8xf32> to vector<8xf32>
    %100 = vector.shape_cast %99 : vector<8xf32> to vector<8x1xf32>
    %101 = vector.broadcast %100 : vector<8x1xf32> to vector<8x8xf32>
    %102 = arith.subf %98, %101 : vector<8x8xf32>
    %103 = math.exp %102 : vector<8x8xf32>
    %cst_43 = arith.constant dense<0.000000e+00> : vector<8xf32>
    %104 = vector.multi_reduction <add>, %103, %cst_43 [1] : vector<8x8xf32> to vector<8xf32>
    %105 = vector.shape_cast %104 : vector<8xf32> to vector<8x1xf32>
    %106 = tpu.reciprocal %105 {approx = true} : vector<8x1xf32> -> vector<8x1xf32>
    %107 = vector.broadcast %106 : vector<8x1xf32> to vector<8x8xf32>
    %108 = arith.mulf %103, %107 : vector<8x8xf32>
    %109 = arith.truncf %108 : vector<8x8xf32> to vector<8x8xbf16>
    %110 = vector.extract_strided_slice %52 {offsets = [0, 16], sizes = [8, 8], strides = [1, 1]} : vector<8x32xbf16> to vector<8x8xbf16>
    %cst_44 = arith.constant dense<0.000000e+00> : vector<8x8xf32>
    %111 = tpu.matmul %109, %110, %cst_44 {dimension_numbers = #tpu.dot_dimension_numbers<[1], [0], [0], [1], [0, 0, 1, 1], [], []>} : vector<8x8xbf16>, vector<8x8xbf16>, vector<8x8xf32> -> vector<8x8xf32>
    %112 = arith.truncf %111 : vector<8x8xf32> to vector<8x8xbf16>
    %c2 = arith.constant 2 : index
    %c0_45 = arith.constant 0 : index
    %c0_46 = arith.constant 0 : index
    %113 = vector.load %arg10[%c2, %c0_45, %c0_46] : memref<4x8x32xbf16, #tpu.memory_space<vmem>>, vector<1x8x32xbf16>
    %114 = vector.shape_cast %113 : vector<1x8x32xbf16> to vector<8x32xbf16>
    %cst_47 = arith.constant dense<0.000000e+00> : vector<8x32xf32>
    %115 = tpu.matmul %112, %114, %cst_47 {dimension_numbers = #tpu.dot_dimension_numbers<[1], [0], [0], [1], [0, 0, 1, 1], [], []>} : vector<8x8xbf16>, vector<8x32xbf16>, vector<8x32xf32> -> vector<8x32xf32>
    %116 = arith.addf %95, %115 : vector<8x32xf32>
    %117 = vector.extract_strided_slice %50 {offsets = [0, 24], sizes = [8, 8], strides = [1, 1]} : vector<8x32xbf16> to vector<8x8xbf16>
    %118 = vector.extract_strided_slice %51 {offsets = [0, 24], sizes = [8, 8], strides = [1, 1]} : vector<8x32xbf16> to vector<8x8xbf16>
    %cst_48 = arith.constant dense<0.000000e+00> : vector<8x8xf32>
    %119 = tpu.matmul %117, %118, %cst_48 {dimension_numbers = #tpu.dot_dimension_numbers<[1], [1], [0], [0], [0, 0, 1, 0], [], []>} : vector<8x8xbf16>, vector<8x8xbf16>, vector<8x8xf32> -> vector<8x8xf32>
    %cst_49 = arith.constant dense<0xFF800000> : vector<8xf32>
    %120 = vector.multi_reduction <maximumf>, %119, %cst_49 [1] : vector<8x8xf32> to vector<8xf32>
    %121 = vector.shape_cast %120 : vector<8xf32> to vector<8x1xf32>
    %122 = vector.broadcast %121 : vector<8x1xf32> to vector<8x8xf32>
    %123 = arith.subf %119, %122 : vector<8x8xf32>
    %124 = math.exp %123 : vector<8x8xf32>
    %cst_50 = arith.constant dense<0.000000e+00> : vector<8xf32>
    %125 = vector.multi_reduction <add>, %124, %cst_50 [1] : vector<8x8xf32> to vector<8xf32>
    %126 = vector.shape_cast %125 : vector<8xf32> to vector<8x1xf32>
    %127 = tpu.reciprocal %126 {approx = true} : vector<8x1xf32> -> vector<8x1xf32>
    %128 = vector.broadcast %127 : vector<8x1xf32> to vector<8x8xf32>
    %129 = arith.mulf %124, %128 : vector<8x8xf32>
    %130 = arith.truncf %129 : vector<8x8xf32> to vector<8x8xbf16>
    %131 = vector.extract_strided_slice %52 {offsets = [0, 24], sizes = [8, 8], strides = [1, 1]} : vector<8x32xbf16> to vector<8x8xbf16>
    %cst_51 = arith.constant dense<0.000000e+00> : vector<8x8xf32>
    %132 = tpu.matmul %130, %131, %cst_51 {dimension_numbers = #tpu.dot_dimension_numbers<[1], [0], [0], [1], [0, 0, 1, 1], [], []>} : vector<8x8xbf16>, vector<8x8xbf16>, vector<8x8xf32> -> vector<8x8xf32>
    %133 = arith.truncf %132 : vector<8x8xf32> to vector<8x8xbf16>
    %c3 = arith.constant 3 : index
    %c0_52 = arith.constant 0 : index
    %c0_53 = arith.constant 0 : index
    %134 = vector.load %arg10[%c3, %c0_52, %c0_53] : memref<4x8x32xbf16, #tpu.memory_space<vmem>>, vector<1x8x32xbf16>
    %135 = vector.shape_cast %134 : vector<1x8x32xbf16> to vector<8x32xbf16>
    %cst_54 = arith.constant dense<0.000000e+00> : vector<8x32xf32>
    %136 = tpu.matmul %133, %135, %cst_54 {dimension_numbers = #tpu.dot_dimension_numbers<[1], [0], [0], [1], [0, 0, 1, 1], [], []>} : vector<8x8xbf16>, vector<8x32xbf16>, vector<8x32xf32> -> vector<8x32xf32>
    %137 = arith.addf %116, %136 : vector<8x32xf32>
    %138 = arith.addf %1, %137 : vector<8x32xf32>
    %c0_55 = arith.constant 0 : index
    %c0_56 = arith.constant 0 : index
    %139 = vector.load %arg11[%c0_55, %c0_56] : memref<1x32xf32, #tpu.memory_space<vmem>>, vector<1x32xf32>
    %140 = vector.shape_cast %139 : vector<1x32xf32> to vector<32xf32>
    %141 = vector.shape_cast %140 : vector<32xf32> to vector<1x32xf32>
    %142 = vector.broadcast %141 : vector<1x32xf32> to vector<8x32xf32>
    %143 = arith.addf %138, %142 : vector<8x32xf32>
    %c0_57 = arith.constant 0 : index
    %c0_58 = arith.constant 0 : index
    %144 = vector.load %arg12[%c0_57, %c0_58] : memref<1x32xf32, #tpu.memory_space<vmem>>, vector<1x32xf32>
    %145 = vector.shape_cast %144 : vector<1x32xf32> to vector<32xf32>
    %c0_59 = arith.constant 0 : index
    %c0_60 = arith.constant 0 : index
    %146 = vector.load %arg13[%c0_59, %c0_60] : memref<1x32xf32, #tpu.memory_space<vmem>>, vector<1x32xf32>
    %147 = vector.shape_cast %146 : vector<1x32xf32> to vector<32xf32>
    %cst_61 = arith.constant dense<0.000000e+00> : vector<8xf32>
    %148 = vector.multi_reduction <add>, %143, %cst_61 [1] : vector<8x32xf32> to vector<8xf32>
    %149 = vector.shape_cast %148 : vector<8xf32> to vector<8x1xf32>
    %cst_62 = arith.constant 3.200000e+01 : f32
    %150 = vector.broadcast %cst_62 : f32 to vector<8x1xf32>
    %151 = arith.divf %149, %150 : vector<8x1xf32>
    %152 = vector.broadcast %151 : vector<8x1xf32> to vector<8x32xf32>
    %153 = arith.subf %143, %152 : vector<8x32xf32>
    %154 = arith.mulf %153, %153 : vector<8x32xf32>
    %cst_63 = arith.constant dense<0.000000e+00> : vector<8xf32>
    %155 = vector.multi_reduction <add>, %154, %cst_63 [1] : vector<8x32xf32> to vector<8xf32>
    %156 = vector.shape_cast %155 : vector<8xf32> to vector<8x1xf32>
    %cst_64 = arith.constant 3.200000e+01 : f32
    %157 = vector.broadcast %cst_64 : f32 to vector<8x1xf32>
    %158 = arith.divf %156, %157 : vector<8x1xf32>
    %cst_65 = arith.constant 9.99999997E-7 : f32
    %159 = vector.broadcast %cst_65 : f32 to vector<8x1xf32>
    %160 = arith.addf %158, %159 : vector<8x1xf32>
    %161 = math.rsqrt %160 : vector<8x1xf32>
    %162 = vector.broadcast %161 : vector<8x1xf32> to vector<8x32xf32>
    %163 = arith.mulf %153, %162 : vector<8x32xf32>
    %164 = vector.shape_cast %145 : vector<32xf32> to vector<1x32xf32>
    %165 = vector.broadcast %164 : vector<1x32xf32> to vector<8x32xf32>
    %166 = arith.mulf %163, %165 : vector<8x32xf32>
    %167 = vector.shape_cast %147 : vector<32xf32> to vector<1x32xf32>
    %168 = vector.broadcast %167 : vector<1x32xf32> to vector<8x32xf32>
    %169 = arith.addf %166, %168 : vector<8x32xf32>
    %170 = arith.truncf %169 : vector<8x32xf32> to vector<8x32xbf16>
    %c0_66 = arith.constant 0 : index
    %c0_67 = arith.constant 0 : index
    %171 = vector.load %arg14[%c0_66, %c0_67] : memref<32x128xbf16, #tpu.memory_space<vmem>>, vector<32x128xbf16>
    %cst_68 = arith.constant dense<0.000000e+00> : vector<8x128xf32>
    %172 = tpu.matmul %170, %171, %cst_68 {dimension_numbers = #tpu.dot_dimension_numbers<[1], [0], [0], [1], [0, 0, 1, 1], [], []>} : vector<8x32xbf16>, vector<32x128xbf16>, vector<8x128xf32> -> vector<8x128xf32>
    %c0_69 = arith.constant 0 : index
    %c0_70 = arith.constant 0 : index
    %173 = vector.load %arg15[%c0_69, %c0_70] : memref<1x128xf32, #tpu.memory_space<vmem>>, vector<1x128xf32>
    %174 = vector.shape_cast %173 : vector<1x128xf32> to vector<128xf32>
    %175 = vector.shape_cast %174 : vector<128xf32> to vector<1x128xf32>
    %176 = vector.broadcast %175 : vector<1x128xf32> to vector<8x128xf32>
    %177 = arith.addf %172, %176 : vector<8x128xf32>
    %cst_71 = arith.constant 5.000000e-01 : f32
    %178 = vector.broadcast %cst_71 : f32 to vector<8x128xf32>
    %179 = arith.mulf %178, %177 : vector<8x128xf32>
    %cst_72 = arith.constant 0.707106769 : f32
    %180 = vector.broadcast %cst_72 : f32 to vector<8x128xf32>
    %181 = arith.mulf %177, %180 : vector<8x128xf32>
    %cst_73 = arith.constant -4.000000e+00 : f32
    %cst_74 = arith.constant 4.000000e+00 : f32
    %182 = vector.broadcast %cst_73 : f32 to vector<8x128xf32>
    %183 = arith.maximumf %182, %181 : vector<8x128xf32>
    %184 = vector.broadcast %cst_74 : f32 to vector<8x128xf32>
    %185 = arith.minimumf %184, %183 : vector<8x128xf32>
    %186 = arith.mulf %185, %185 : vector<8x128xf32>
    %cst_75 = arith.constant 2.29050653E-4 : f32
    %187 = vector.broadcast %cst_75 : f32 to vector<8x128xf32>
    %188 = arith.mulf %187, %186 : vector<8x128xf32>
    %cst_76 = arith.constant 0.00340829091 : f32
    %189 = vector.broadcast %cst_76 : f32 to vector<8x128xf32>
    %190 = arith.addf %188, %189 : vector<8x128xf32>
    %191 = arith.mulf %190, %186 : vector<8x128xf32>
    %cst_77 = arith.constant 0.0509556942 : f32
    %192 = vector.broadcast %cst_77 : f32 to vector<8x128xf32>
    %193 = arith.addf %191, %192 : vector<8x128xf32>
    %194 = arith.mulf %193, %186 : vector<8x128xf32>
    %cst_78 = arith.constant 0.185208321 : f32
    %195 = vector.broadcast %cst_78 : f32 to vector<8x128xf32>
    %196 = arith.addf %194, %195 : vector<8x128xf32>
    %197 = arith.mulf %196, %186 : vector<8x128xf32>
    %cst_79 = arith.constant 1.12837911 : f32
    %198 = vector.broadcast %cst_79 : f32 to vector<8x128xf32>
    %199 = arith.addf %197, %198 : vector<8x128xf32>
    %200 = arith.mulf %185, %199 : vector<8x128xf32>
    %cst_80 = arith.constant -1.17916031E-7 : f32
    %201 = vector.broadcast %cst_80 : f32 to vector<8x128xf32>
    %202 = arith.mulf %201, %186 : vector<8x128xf32>
    %cst_81 = arith.constant 2.35479656E-5 : f32
    %203 = vector.broadcast %cst_81 : f32 to vector<8x128xf32>
    %204 = arith.addf %202, %203 : vector<8x128xf32>
    %205 = arith.mulf %204, %186 : vector<8x128xf32>
    %cst_82 = arith.constant 0.00101796258 : f32
    %206 = vector.broadcast %cst_82 : f32 to vector<8x128xf32>
    %207 = arith.addf %205, %206 : vector<8x128xf32>
    %208 = arith.mulf %207, %186 : vector<8x128xf32>
    %cst_83 = arith.constant 0.0140704699 : f32
    %209 = vector.broadcast %cst_83 : f32 to vector<8x128xf32>
    %210 = arith.addf %208, %209 : vector<8x128xf32>
    %211 = arith.mulf %210, %186 : vector<8x128xf32>
    %cst_84 = arith.constant 0.110985048 : f32
    %212 = vector.broadcast %cst_84 : f32 to vector<8x128xf32>
    %213 = arith.addf %211, %212 : vector<8x128xf32>
    %214 = arith.mulf %213, %186 : vector<8x128xf32>
    %cst_85 = arith.constant 0.497469246 : f32
    %215 = vector.broadcast %cst_85 : f32 to vector<8x128xf32>
    %216 = arith.addf %214, %215 : vector<8x128xf32>
    %217 = arith.mulf %216, %186 : vector<8x128xf32>
    %cst_86 = arith.constant 1.000000e+00 : f32
    %218 = vector.broadcast %cst_86 : f32 to vector<8x128xf32>
    %219 = arith.addf %217, %218 : vector<8x128xf32>
    %220 = arith.divf %200, %219 : vector<8x128xf32>
    %cst_87 = arith.constant 1.000000e+00 : f32
    %221 = vector.broadcast %cst_87 : f32 to vector<8x128xf32>
    %222 = arith.addf %221, %220 : vector<8x128xf32>
    %223 = arith.mulf %179, %222 : vector<8x128xf32>
    %224 = arith.truncf %223 : vector<8x128xf32> to vector<8x128xbf16>
    %c0_88 = arith.constant 0 : index
    %c0_89 = arith.constant 0 : index
    %225 = vector.load %arg16[%c0_88, %c0_89] : memref<128x32xbf16, #tpu.memory_space<vmem>>, vector<128x32xbf16>
    %cst_90 = arith.constant dense<0.000000e+00> : vector<8x32xf32>
    %226 = tpu.matmul %224, %225, %cst_90 {dimension_numbers = #tpu.dot_dimension_numbers<[1], [0], [0], [1], [0, 0, 1, 1], [], []>} : vector<8x128xbf16>, vector<128x32xbf16>, vector<8x32xf32> -> vector<8x32xf32>
    %c0_91 = arith.constant 0 : index
    %c0_92 = arith.constant 0 : index
    %227 = vector.load %arg17[%c0_91, %c0_92] : memref<1x32xf32, #tpu.memory_space<vmem>>, vector<1x32xf32>
    %228 = vector.shape_cast %227 : vector<1x32xf32> to vector<32xf32>
    %229 = vector.shape_cast %228 : vector<32xf32> to vector<1x32xf32>
    %230 = vector.broadcast %229 : vector<1x32xf32> to vector<8x32xf32>
    %231 = arith.addf %226, %230 : vector<8x32xf32>
    %232 = arith.addf %143, %231 : vector<8x32xf32>
    %c0_93 = arith.constant 0 : index
    %c0_94 = arith.constant 0 : index
    %c0_95 = arith.constant 0 : index
    %233 = vector.load %arg18[%c0_93, %c0_94, %c0_95] : memref<1x8x32xf32, #tpu.memory_space<vmem>>, vector<1x8x32xf32>
    %234 = vector.shape_cast %233 : vector<1x8x32xf32> to vector<8x32xf32>
    %235 = vector.shape_cast %232 : vector<8x32xf32> to vector<1x8x32xf32>
    tpu.vector_store %arg18[%c0_93, %c0_94, %c0_95], %235 {strides = array<i32>} : memref<1x8x32xf32, #tpu.memory_space<vmem>>, vector<1x8x32xf32>,
    return
  }
  func.func @transform_0(%arg0: i32) -> (i32, i32, i32) {
    %c0_i32 = arith.constant 0 : i32
    %c0_i32_0 = arith.constant 0 : i32
    %c0_i32_1 = arith.constant 0 : i32
    return %arg0, %c0_i32, %c0_i32_0 : i32, i32, i32
  }
  func.func @transform_1(%arg0: i32) -> (i32, i32) {
    %c0_i32 = arith.constant 0 : i32
    %c0_i32_0 = arith.constant 0 : i32
    %c0_i32_1 = arith.constant 0 : i32
    return %c0_i32, %c0_i32_0 : i32, i32
  }
  func.func @transform_2(%arg0: i32) -> (i32, i32) {
    %c0_i32 = arith.constant 0 : i32
    %c0_i32_0 = arith.constant 0 : i32
    %c0_i32_1 = arith.constant 0 : i32
    return %c0_i32, %c0_i32_0 : i32, i32
  }
  func.func @transform_3(%arg0: i32) -> (i32, i32) {
    %c0_i32 = arith.constant 0 : i32
    %c0_i32_0 = arith.constant 0 : i32
    %c0_i32_1 = arith.constant 0 : i32
    return %c0_i32, %c0_i32_0 : i32, i32
  }
  func.func @transform_4(%arg0: i32) -> (i32, i32) {
    %c0_i32 = arith.constant 0 : i32
    %c0_i32_0 = arith.constant 0 : i32
    %c0_i32_1 = arith.constant 0 : i32
    return %c0_i32, %c0_i32_0 : i32, i32
  }
  func.func @transform_5(%arg0: i32) -> (i32, i32) {
    %c0_i32 = arith.constant 0 : i32
    %c0_i32_0 = arith.constant 0 : i32
    %c0_i32_1 = arith.constant 0 : i32
    return %c0_i32, %c0_i32_0 : i32, i32
  }
  func.func @transform_6(%arg0: i32) -> (i32, i32) {
    %c0_i32 = arith.constant 0 : i32
    %c0_i32_0 = arith.constant 0 : i32
    %c0_i32_1 = arith.constant 0 : i32
    return %c0_i32, %c0_i32_0 : i32, i32
  }
  func.func @transform_7(%arg0: i32) -> (i32, i32) {
    %c0_i32 = arith.constant 0 : i32
    %c0_i32_0 = arith.constant 0 : i32
    %c0_i32_1 = arith.constant 0 : i32
    return %c0_i32, %c0_i32_0 : i32, i32
  }
  func.func @transform_8(%arg0: i32) -> (i32, i32) {
    %c0_i32 = arith.constant 0 : i32
    %c0_i32_0 = arith.constant 0 : i32
    %c0_i32_1 = arith.constant 0 : i32
    return %c0_i32, %c0_i32_0 : i32, i32
  }
  func.func @transform_9(%arg0: i32) -> (i32, i32, i32) {
    %c0_i32 = arith.constant 0 : i32
    %c0_i32_0 = arith.constant 0 : i32
    %c0_i32_1 = arith.constant 0 : i32
    %c0_i32_2 = arith.constant 0 : i32
    return %c0_i32, %c0_i32_0, %c0_i32_1 : i32, i32, i32
  }
  func.func @transform_10(%arg0: i32) -> (i32, i32) {
    %c0_i32 = arith.constant 0 : i32
    %c0_i32_0 = arith.constant 0 : i32
    %c0_i32_1 = arith.constant 0 : i32
    return %c0_i32, %c0_i32_0 : i32, i32
  }
  func.func @transform_11(%arg0: i32) -> (i32, i32) {
    %c0_i32 = arith.constant 0 : i32
    %c0_i32_0 = arith.constant 0 : i32
    %c0_i32_1 = arith.constant 0 : i32
    return %c0_i32, %c0_i32_0 : i32, i32
  }
  func.func @transform_12(%arg0: i32) -> (i32, i32) {
    %c0_i32 = arith.constant 0 : i32
    %c0_i32_0 = arith.constant 0 : i32
    %c0_i32_1 = arith.constant 0 : i32
    return %c0_i32, %c0_i32_0 : i32, i32
  }
  func.func @transform_13(%arg0: i32) -> (i32, i32) {
    %c0_i32 = arith.constant 0 : i32
    %c0_i32_0 = arith.constant 0 : i32
    %c0_i32_1 = arith.constant 0 : i32
    return %c0_i32, %c0_i32_0 : i32, i32
  }
  func.func @transform_14(%arg0: i32) -> (i32, i32) {
    %c0_i32 = arith.constant 0 : i32
    %c0_i32_0 = arith.constant 0 : i32
    %c0_i32_1 = arith.constant 0 : i32
    return %c0_i32, %c0_i32_0 : i32, i32
  }
  func.func @transform_15(%arg0: i32) -> (i32, i32) {
    %c0_i32 = arith.constant 0 : i32
    %c0_i32_0 = arith.constant 0 : i32
    %c0_i32_1 = arith.constant 0 : i32
    return %c0_i32, %c0_i32_0 : i32, i32
  }
  func.func @transform_16(%arg0: i32) -> (i32, i32) {
    %c0_i32 = arith.constant 0 : i32
    %c0_i32_0 = arith.constant 0 : i32
    %c0_i32_1 = arith.constant 0 : i32
    return %c0_i32, %c0_i32_0 : i32, i32
  }
  func.func @transform_17(%arg0: i32) -> (i32, i32, i32) {
    %c0_i32 = arith.constant 0 : i32
    %c0_i32_0 = arith.constant 0 : i32
    %c0_i32_1 = arith.constant 0 : i32
    return %arg0, %c0_i32, %c0_i32_0 : i32, i32, i32
  }
}

</mosaic_0001>

<llo_original>
// kernel: tpu_custom_call.1
$region0: #{tpu_custom_call.1}
  #allocation0 [shape = 'u32[]', space=smem, size = 0x4, offset = 0x4, fixed_abs, tag = 'smem constant byte address 0x4 - core index']
  #allocation1 [shape = 'u32[144,128]{1,0:T(1,128)}', space=vmem, size = 0x12000, scoped, tag = 'internal scratch']
  %s0 = inlined_call_operand.vmem [shape: f32[2,8,32], index: 0, kind: input, shape index: {}]
  %s1 = inlined_call_operand.vmem [shape: f32[1,32], index: 1, kind: input, shape index: {}]
  %s2 = inlined_call_operand.vmem [shape: f32[1,32], index: 2, kind: input, shape index: {}]
  %s3 = inlined_call_operand.vmem [shape: bf16[32,32], index: 3, kind: input, shape index: {}]
  %s4 = inlined_call_operand.vmem [shape: bf16[32,32], index: 4, kind: input, shape index: {}]
  %s5 = inlined_call_operand.vmem [shape: bf16[32,32], index: 5, kind: input, shape index: {}]
  %s6 = inlined_call_operand.hbm [shape: f32[1,32], index: 6, kind: input, shape index: {}]
  %s7 = inlined_call_operand.hbm [shape: f32[1,32], index: 7, kind: input, shape index: {}]
  %s8 = inlined_call_operand.hbm [shape: f32[1,32], index: 8, kind: input, shape index: {}]
  %s9 = inlined_call_operand.vmem [shape: bf16[4,8,32], index: 9, kind: input, shape index: {}]
  %s10 = inlined_call_operand.vmem [shape: f32[1,32], index: 10, kind: input, shape index: {}]
  %s11 = inlined_call_operand.vmem [shape: f32[1,32], index: 11, kind: input, shape index: {}]
  %s12 = inlined_call_operand.vmem [shape: f32[1,32], index: 12, kind: input, shape index: {}]
  %s13 = inlined_call_operand.vmem [shape: bf16[32,128], index: 13, kind: input, shape index: {}]
  %s14 = inlined_call_operand.vmem [shape: f32[1,128], index: 14, kind: input, shape index: {}]
  %s15 = inlined_call_operand.vmem [shape: bf16[128,32], index: 15, kind: input, shape index: {}]
  %s16 = inlined_call_operand.vmem [shape: f32[1,32], index: 16, kind: input, shape index: {}]
  %s17 = inlined_call_operand.hbm [shape: f32[2,8,32], index: 17, kind: output, shape index: {}]
  %s18 = sld [smem:[#allocation0]]
  $region113: #{tpu_custom_call.1} parent=0
    _
  %s20 = ssub.s32 1, %s18
  %s21 = scalar_select 0, %s20, %s18
  $region1: #{tpu_custom_call.1} parent=0
    #allocation2 [shape = 'u8[512]{0}', space=vmem, size = 0x400, scoped, tag = 'input window, operand 6, single buffered']
    #allocation3 [shape = 's32[2]{0}', space=sflag, size = 0x8, scoped, tag = 'scoped memory for tpu_custom_call.1']
    #allocation4 [shape = 's32[2]{0}', space=sflag, size = 0x8, scoped, tag = 'scoped memory for tpu_custom_call.1']
    #allocation5 [shape = 'u8[512]{0}', space=vmem, size = 0x400, scoped, tag = 'input window, operand 7, single buffered']
    #allocation6 [shape = 's32[1]{0}', space=sflag, size = 0x4, scoped, tag = 'scoped memory for tpu_custom_call.1']
    #allocation7 [shape = 'u8[512]{0}', space=vmem, size = 0x400, scoped, tag = 'input window, operand 8, single buffered']
    #allocation8 [shape = 'u8[8192]{0}', space=vmem, size = 0x2000, scoped, tag = 'output window, operand 0']
    %22 = vsyncpa [#allocation3], 0
    %23 = vsyncpa [#allocation6], 0
    %24 = vsyncpa [#allocation4], 0
    %s25 = scalar_lea.sflag [#allocation4], 1
    %26 = vsyncpa %s25, 0
    loop: start=0, step=1, limit=4
    $region2: #{tpu_custom_call.1} parent=1 // loop_pre_header
      _
    $region3: #{tpu_custom_call.1} parent=1 // loop_header
      %s28 = sphi 0, %s32
      %p29 = scmp.ge.s32.totalorder %s28, 4
      %s38 = sphi 0, %s40
      %s41 = sphi 0, %s38
      %s42 = sphi 0, %s41
      %s58 = sphi 0, %s42
      %s62 = sphi 0, %s62
      %s64 = sphi 0, %s62
      %s65 = sphi 0, %s64
      %s79 = sphi 0, %s65
      %s83 = sphi 0, %s83
      %s85 = sphi 0, %s83
      %s86 = sphi 0, %s85
      %s100 = sphi 0, %s86
      %s104 = sphi 0, %s104
      %s106 = sphi 0, %s104
      %s107 = sphi 0, %s106
      %s121 = sphi 0, %s107
      %s125 = sphi 0, %s125
      %s127 = sphi 0, %s125
      %s128 = sphi 0, %s127
      %s142 = sphi 0, %s128
      %s146 = sphi 0, %s146
      %s148 = sphi 0, %s146
      %s149 = sphi 0, %s148
      %s163 = sphi 0, %s149
      %s167 = sphi 0, %s167
      %s169 = sphi 0, %s167
      %s170 = sphi 0, %s169
      %s184 = sphi 0, %s170
      %s188 = sphi 0, %s188
      %s190 = sphi 0, %s188
      %s191 = sphi 0, %s190
      %s205 = sphi 0, %s191
      %s209 = sphi 0, %s209
      %s211 = sphi 0, %s209
      %s212 = sphi 0, %s211
      %s226 = sphi 0, %s212
      %s230 = sphi 0, %s230
      %s232 = sphi 0, %s230
      %s233 = sphi 0, %s232
      %s247 = sphi 0, %s233
      %s251 = sphi 0, %s251
      %s253 = sphi 0, %s251
      %s254 = sphi 0, %s253
      %s268 = sphi 0, %s254
      %s272 = sphi 0, %s272
      %s274 = sphi 0, %s272
      %s275 = sphi 0, %s274
      %s289 = sphi 0, %s275
      %s293 = sphi 0, %s293
      %s295 = sphi 0, %s293
      %s296 = sphi 0, %s295
      %s310 = sphi 0, %s296
      %s314 = sphi 0, %s314
      %s316 = sphi 0, %s314
      %s317 = sphi 0, %s316
      %s331 = sphi 0, %s317
      %s335 = sphi 0, %s335
      %s337 = sphi 0, %s335
      %s338 = sphi 0, %s337
      %s352 = sphi 0, %s338
      %s356 = sphi 0, %s356
      %s358 = sphi 0, %s356
      %s359 = sphi 0, %s358
      %s373 = sphi 0, %s359
      %s377 = sphi 0, %s377
      %s379 = sphi 0, %s377
      %s380 = sphi 0, %s379
      %s394 = sphi 0, %s380
      %s400 = sphi 0, %s402
      %s403 = sphi 0, %s400
      %s404 = sphi 0, %s403
      %s420 = sphi 0, %s404
    $region4: #{tpu_custom_call.1} parent=1 // loop_header_branch
      %31 = sbr.rel (%p29) target = $region8
    $region5: #{tpu_custom_call.1} parent=1 // loop_body
      %s33 = ssub.s32 %s28, 1
      %s34 = ssub.s32 %s28, 2
      %s35 = sadd.s32 %s28, 1
      %s36 = ssub.s32 %s28, %s35
      %p37 = scmp.eq.s32.totalorder %s36, 0
      %s39 = sadd.s32 %s38, 1
      %s40 = scalar_select %p37, %s38, %s39
      %p43 = pneg %p37
      %p44 = scmp.eq.s32.totalorder %s28, 1
      %p45 = por %p43, %p44
      %p46 = scmp.ne.s32.totalorder %s38, %s41
      %p47 = scmp.eq.s32.totalorder %s28, 0
      %p48 = por %p46, %p47
      %p49 = scmp.ne.s32.totalorder %s38, %s41
      %p50 = scmp.eq.s32.totalorder %s33, 1
      %p51 = por %p49, %p50
      %p52 = scmp.ne.s32.totalorder %s41, %s42
      %p53 = scmp.eq.s32.totalorder %s33, 0
      %p54 = por %p52, %p53
      %p55 = scmp.ne.s32.totalorder %s41, %s42
      %p56 = scmp.eq.s32.totalorder %s34, 1
      %p57 = por %p55, %p56
      %p59 = scmp.ne.s32.totalorder %s42, %s58
      %p60 = scmp.eq.s32.totalorder %s34, 0
      %p61 = por %p59, %p60
      %s63 = sadd.s32 %s62, 1
      %p66 = scmp.eq.s32.totalorder %s28, 1
      %p67 = scmp.ne.s32.totalorder %s62, %s64
      %p68 = scmp.eq.s32.totalorder %s28, 0
      %p69 = por %p67, %p68
      %p70 = scmp.ne.s32.totalorder %s62, %s64
      %p71 = scmp.eq.s32.totalorder %s33, 1
      %p72 = por %p70, %p71
      %p73 = scmp.ne.s32.totalorder %s64, %s65
      %p74 = scmp.eq.s32.totalorder %s33, 0
      %p75 = por %p73, %p74
      %p76 = scmp.ne.s32.totalorder %s64, %s65
      %p77 = scmp.eq.s32.totalorder %s34, 1
      %p78 = por %p76, %p77
      %p80 = scmp.ne.s32.totalorder %s65, %s79
      %p81 = scmp.eq.s32.totalorder %s34, 0
      %p82 = por %p80, %p81
      %s84 = sadd.s32 %s83, 1
      %p87 = scmp.eq.s32.totalorder %s28, 1
      %p88 = scmp.ne.s32.totalorder %s83, %s85
      %p89 = scmp.eq.s32.totalorder %s28, 0
      %p90 = por %p88, %p89
      %p91 = scmp.ne.s32.totalorder %s83, %s85
      %p92 = scmp.eq.s32.totalorder %s33, 1
      %p93 = por %p91, %p92
      %p94 = scmp.ne.s32.totalorder %s85, %s86
      %p95 = scmp.eq.s32.totalorder %s33, 0
      %p96 = por %p94, %p95
      %p97 = scmp.ne.s32.totalorder %s85, %s86
      %p98 = scmp.eq.s32.totalorder %s34, 1
      %p99 = por %p97, %p98
      %p101 = scmp.ne.s32.totalorder %s86, %s100
      %p102 = scmp.eq.s32.totalorder %s34, 0
      %p103 = por %p101, %p102
      %s105 = sadd.s32 %s104, 1
      %p108 = scmp.eq.s32.totalorder %s28, 1
      %p109 = scmp.ne.s32.totalorder %s104, %s106
      %p110 = scmp.eq.s32.totalorder %s28, 0
      %p111 = por %p109, %p110
      %p112 = scmp.ne.s32.totalorder %s104, %s106
      %p113 = scmp.eq.s32.totalorder %s33, 1
      %p114 = por %p112, %p113
      %p115 = scmp.ne.s32.totalorder %s106, %s107
      %p116 = scmp.eq.s32.totalorder %s33, 0
      %p117 = por %p115, %p116
      %p118 = scmp.ne.s32.totalorder %s106, %s107
      %p119 = scmp.eq.s32.totalorder %s34, 1
      %p120 = por %p118, %p119
      %p122 = scmp.ne.s32.totalorder %s107, %s121
      %p123 = scmp.eq.s32.totalorder %s34, 0
      %p124 = por %p122, %p123
      %s126 = sadd.s32 %s125, 1
      %p129 = scmp.eq.s32.totalorder %s28, 1
      %p130 = scmp.ne.s32.totalorder %s125, %s127
      %p131 = scmp.eq.s32.totalorder %s28, 0
      %p132 = por %p130, %p131
      %p133 = scmp.ne.s32.totalorder %s125, %s127
      %p134 = scmp.eq.s32.totalorder %s33, 1
      %p135 = por %p133, %p134
      %p136 = scmp.ne.s32.totalorder %s127, %s128
      %p137 = scmp.eq.s32.totalorder %s33, 0
      %p138 = por %p136, %p137
      %p139 = scmp.ne.s32.totalorder %s127, %s128
      %p140 = scmp.eq.s32.totalorder %s34, 1
      %p141 = por %p139, %p140
      %p143 = scmp.ne.s32.totalorder %s128, %s142
      %p144 = scmp.eq.s32.totalorder %s34, 0
      %p145 = por %p143, %p144
      %s147 = sadd.s32 %s146, 1
      %p150 = scmp.eq.s32.totalorder %s28, 1
      %p151 = scmp.ne.s32.totalorder %s146, %s148
      %p152 = scmp.eq.s32.totalorder %s28, 0
      %p153 = por %p151, %p152
      %p154 = scmp.ne.s32.totalorder %s146, %s148
      %p155 = scmp.eq.s32.totalorder %s33, 1
      %p156 = por %p154, %p155
      %p157 = scmp.ne.s32.totalorder %s148, %s149
      %p158 = scmp.eq.s32.totalorder %s33, 0
      %p159 = por %p157, %p158
      %p160 = scmp.ne.s32.totalorder %s148, %s149
      %p161 = scmp.eq.s32.totalorder %s34, 1
      %p162 = por %p160, %p161
      %p164 = scmp.ne.s32.totalorder %s149, %s163
      %p165 = scmp.eq.s32.totalorder %s34, 0
      %p166 = por %p164, %p165
      %s168 = sadd.s32 %s167, 1
      %p171 = scmp.eq.s32.totalorder %s28, 1
      %p172 = scmp.ne.s32.totalorder %s167, %s169
      %p173 = scmp.eq.s32.totalorder %s28, 0
      %p174 = por %p172, %p173
      %p175 = scmp.ne.s32.totalorder %s167, %s169
      %p176 = scmp.eq.s32.totalorder %s33, 1
      %p177 = por %p175, %p176
      %p178 = scmp.ne.s32.totalorder %s169, %s170
      %p179 = scmp.eq.s32.totalorder %s33, 0
      %p180 = por %p178, %p179
      %p181 = scmp.ne.s32.totalorder %s169, %s170
      %p182 = scmp.eq.s32.totalorder %s34, 1
      %p183 = por %p181, %p182
      %p185 = scmp.ne.s32.totalorder %s170, %s184
      %p186 = scmp.eq.s32.totalorder %s34, 0
      %p187 = por %p185, %p186
      %s189 = sadd.s32 %s188, 1
      %p192 = scmp.eq.s32.totalorder %s28, 1
      %p193 = scmp.ne.s32.totalorder %s188, %s190
      %p194 = scmp.eq.s32.totalorder %s28, 0
      %p195 = por %p193, %p194
      %p196 = scmp.ne.s32.totalorder %s188, %s190
      %p197 = scmp.eq.s32.totalorder %s33, 1
      %p198 = por %p196, %p197
      %p199 = scmp.ne.s32.totalorder %s190, %s191
      %p200 = scmp.eq.s32.totalorder %s33, 0
      %p201 = por %p199, %p200
      %p202 = scmp.ne.s32.totalorder %s190, %s191
      %p203 = scmp.eq.s32.totalorder %s34, 1
      %p204 = por %p202, %p203
      %p206 = scmp.ne.s32.totalorder %s191, %s205
      %p207 = scmp.eq.s32.totalorder %s34, 0
      %p208 = por %p206, %p207
      %s210 = sadd.s32 %s209, 1
      %p213 = scmp.eq.s32.totalorder %s28, 1
      %p214 = scmp.ne.s32.totalorder %s209, %s211
      %p215 = scmp.eq.s32.totalorder %s28, 0
      %p216 = por %p214, %p215
      %p217 = scmp.ne.s32.totalorder %s209, %s211
      %p218 = scmp.eq.s32.totalorder %s33, 1
      %p219 = por %p217, %p218
      %p220 = scmp.ne.s32.totalorder %s211, %s212
      %p221 = scmp.eq.s32.totalorder %s33, 0
      %p222 = por %p220, %p221
      %p223 = scmp.ne.s32.totalorder %s211, %s212
      %p224 = scmp.eq.s32.totalorder %s34, 1
      %p225 = por %p223, %p224
      %p227 = scmp.ne.s32.totalorder %s212, %s226
      %p228 = scmp.eq.s32.totalorder %s34, 0
      %p229 = por %p227, %p228
      %s231 = sadd.s32 %s230, 1
      %p234 = scmp.eq.s32.totalorder %s28, 1
      %p235 = scmp.ne.s32.totalorder %s230, %s232
      %p236 = scmp.eq.s32.totalorder %s28, 0
      %p237 = por %p235, %p236
      %p238 = scmp.ne.s32.totalorder %s230, %s232
      %p239 = scmp.eq.s32.totalorder %s33, 1
      %p240 = por %p238, %p239
      %p241 = scmp.ne.s32.totalorder %s232, %s233
      %p242 = scmp.eq.s32.totalorder %s33, 0
      %p243 = por %p241, %p242
      %p244 = scmp.ne.s32.totalorder %s232, %s233
      %p245 = scmp.eq.s32.totalorder %s34, 1
      %p246 = por %p244, %p245
      %p248 = scmp.ne.s32.totalorder %s233, %s247
      %p249 = scmp.eq.s32.totalorder %s34, 0
      %p250 = por %p248, %p249
      %s252 = sadd.s32 %s251, 1
      %p255 = scmp.eq.s32.totalorder %s28, 1
      %p256 = scmp.ne.s32.totalorder %s251, %s253
      %p257 = scmp.eq.s32.totalorder %s28, 0
      %p258 = por %p256, %p257
      %p259 = scmp.ne.s32.totalorder %s251, %s253
      %p260 = scmp.eq.s32.totalorder %s33, 1
      %p261 = por %p259, %p260
      %p262 = scmp.ne.s32.totalorder %s253, %s254
      %p263 = scmp.eq.s32.totalorder %s33, 0
      %p264 = por %p262, %p263
      %p265 = scmp.ne.s32.totalorder %s253, %s254
      %p266 = scmp.eq.s32.totalorder %s34, 1
      %p267 = por %p265, %p266
      %p269 = scmp.ne.s32.totalorder %s254, %s268
      %p270 = scmp.eq.s32.totalorder %s34, 0
      %p271 = por %p269, %p270
      %s273 = sadd.s32 %s272, 1
      %p276 = scmp.eq.s32.totalorder %s28, 1
      %p277 = scmp.ne.s32.totalorder %s272, %s274
      %p278 = scmp.eq.s32.totalorder %s28, 0
      %p279 = por %p277, %p278
      %p280 = scmp.ne.s32.totalorder %s272, %s274
      %p281 = scmp.eq.s32.totalorder %s33, 1
      %p282 = por %p280, %p281
      %p283 = scmp.ne.s32.totalorder %s274, %s275
      %p284 = scmp.eq.s32.totalorder %s33, 0
      %p285 = por %p283, %p284
      %p286 = scmp.ne.s32.totalorder %s274, %s275
      %p287 = scmp.eq.s32.totalorder %s34, 1
      %p288 = por %p286, %p287
      %p290 = scmp.ne.s32.totalorder %s275, %s289
      %p291 = scmp.eq.s32.totalorder %s34, 0
      %p292 = por %p290, %p291
      %s294 = sadd.s32 %s293, 1
      %p297 = scmp.eq.s32.totalorder %s28, 1
      %p298 = scmp.ne.s32.totalorder %s293, %s295
      %p299 = scmp.eq.s32.totalorder %s28, 0
      %p300 = por %p298, %p299
      %p301 = scmp.ne.s32.totalorder %s293, %s295
      %p302 = scmp.eq.s32.totalorder %s33, 1
      %p303 = por %p301, %p302
      %p304 = scmp.ne.s32.totalorder %s295, %s296
      %p305 = scmp.eq.s32.totalorder %s33, 0
      %p306 = por %p304, %p305
      %p307 = scmp.ne.s32.totalorder %s295, %s296
      %p308 = scmp.eq.s32.totalorder %s34, 1
      %p309 = por %p307, %p308
      %p311 = scmp.ne.s32.totalorder %s296, %s310
      %p312 = scmp.eq.s32.totalorder %s34, 0
      %p313 = por %p311, %p312
      %s315 = sadd.s32 %s314, 1
      %p318 = scmp.eq.s32.totalorder %s28, 1
      %p319 = scmp.ne.s32.totalorder %s314, %s316
      %p320 = scmp.eq.s32.totalorder %s28, 0
      %p321 = por %p319, %p320
      %p322 = scmp.ne.s32.totalorder %s314, %s316
      %p323 = scmp.eq.s32.totalorder %s33, 1
      %p324 = por %p322, %p323
      %p325 = scmp.ne.s32.totalorder %s316, %s317
      %p326 = scmp.eq.s32.totalorder %s33, 0
      %p327 = por %p325, %p326
      %p328 = scmp.ne.s32.totalorder %s316, %s317
      %p329 = scmp.eq.s32.totalorder %s34, 1
      %p330 = por %p328, %p329
      %p332 = scmp.ne.s32.totalorder %s317, %s331
      %p333 = scmp.eq.s32.totalorder %s34, 0
      %p334 = por %p332, %p333
      %s336 = sadd.s32 %s335, 1
      %p339 = scmp.eq.s32.totalorder %s28, 1
      %p340 = scmp.ne.s32.totalorder %s335, %s337
      %p341 = scmp.eq.s32.totalorder %s28, 0
      %p342 = por %p340, %p341
      %p343 = scmp.ne.s32.totalorder %s335, %s337
      %p344 = scmp.eq.s32.totalorder %s33, 1
      %p345 = por %p343, %p344
      %p346 = scmp.ne.s32.totalorder %s337, %s338
      %p347 = scmp.eq.s32.totalorder %s33, 0
      %p348 = por %p346, %p347
      %p349 = scmp.ne.s32.totalorder %s337, %s338
      %p350 = scmp.eq.s32.totalorder %s34, 1
      %p351 = por %p349, %p350
      %p353 = scmp.ne.s32.totalorder %s338, %s352
      %p354 = scmp.eq.s32.totalorder %s34, 0
      %p355 = por %p353, %p354
      %s357 = sadd.s32 %s356, 1
      %p360 = scmp.eq.s32.totalorder %s28, 1
      %p361 = scmp.ne.s32.totalorder %s356, %s358
      %p362 = scmp.eq.s32.totalorder %s28, 0
      %p363 = por %p361, %p362
      %p364 = scmp.ne.s32.totalorder %s356, %s358
      %p365 = scmp.eq.s32.totalorder %s33, 1
      %p366 = por %p364, %p365
      %p367 = scmp.ne.s32.totalorder %s358, %s359
      %p368 = scmp.eq.s32.totalorder %s33, 0
      %p369 = por %p367, %p368
      %p370 = scmp.ne.s32.totalorder %s358, %s359
      %p371 = scmp.eq.s32.totalorder %s34, 1
      %p372 = por %p370, %p371
      %p374 = scmp.ne.s32.totalorder %s359, %s373
      %p375 = scmp.eq.s32.totalorder %s34, 0
      %p376 = por %p374, %p375
      %s378 = sadd.s32 %s377, 1
      %p381 = scmp.eq.s32.totalorder %s28, 1
      %p382 = scmp.ne.s32.totalorder %s377, %s379
      %p383 = scmp.eq.s32.totalorder %s28, 0
      %p384 = por %p382, %p383
      %p385 = scmp.ne.s32.totalorder %s377, %s379
      %p386 = scmp.eq.s32.totalorder %s33, 1
      %p387 = por %p385, %p386
      %p388 = scmp.ne.s32.totalorder %s379, %s380
      %p389 = scmp.eq.s32.totalorder %s33, 0
      %p390 = por %p388, %p389
      %p391 = scmp.ne.s32.totalorder %s379, %s380
      %p392 = scmp.eq.s32.totalorder %s34, 1
      %p393 = por %p391, %p392
      %p395 = scmp.ne.s32.totalorder %s380, %s394
      %p396 = scmp.eq.s32.totalorder %s34, 0
      %p397 = por %p395, %p396
      %s398 = ssub.s32 %s28, %s35
      %p399 = scmp.eq.s32.totalorder %s398, 0
      %s401 = sadd.s32 %s400, 1
      %s402 = scalar_select %p399, %s400, %s401
      %p405 = pneg %p399
      %p406 = scmp.eq.s32.totalorder %s28, 1
      %p407 = por %p405, %p406
      %p408 = scmp.ne.s32.totalorder %s400, %s403
      %p409 = scmp.eq.s32.totalorder %s28, 0
      %p410 = por %p408, %p409
      %p411 = scmp.ne.s32.totalorder %s400, %s403
      %p412 = scmp.eq.s32.totalorder %s33, 1
      %p413 = por %p411, %p412
      %p414 = scmp.ne.s32.totalorder %s403, %s404
      %p415 = scmp.eq.s32.totalorder %s33, 0
      %p416 = por %p414, %p415
      %p417 = scmp.ne.s32.totalorder %s403, %s404
      %p418 = scmp.eq.s32.totalorder %s34, 1
      %p419 = por %p417, %p418
      %p421 = scmp.ne.s32.totalorder %s404, %s420
      %p422 = scmp.eq.s32.totalorder %s34, 0
      %p423 = por %p421, %p422
      %p424 = scmp.le.s32.totalorder 1, %s28
      %p425 = scmp.lt.s32.totalorder %s28, 3
      %p426 = pnand %p424, %p425
      %p427 = pneg %p426
      // Predicated region
      $region9: #{tpu_custom_call.1} parent=5 // pred_check
        _
      $region10: #{tpu_custom_call.1} parent=5 // pred_check_branch
        %429 = sbr.rel (%p426) target = $region12
      $region11: #{tpu_custom_call.1} parent=5 // pred_region
        %s430 = ssub.s32 %s28, 1
        // Predicated region
        $region13: #{tpu_custom_call.1} parent=11 // pred_check
          %p431 = pneg %p75
        $region14: #{tpu_custom_call.1} parent=11 // pred_check_branch
          %433 = sbr.rel (%p431) target = $region16
        $region15: #{tpu_custom_call.1} parent=11 // pred_region
          _
        $region16: #{tpu_custom_call.1} parent=11 // pred_fallthru
          _
        // Predicated region
        $region17: #{tpu_custom_call.1} parent=11 // pred_check
          %p434 = pneg %p96
        $region18: #{tpu_custom_call.1} parent=11 // pred_check_branch
          %436 = sbr.rel (%p434) target = $region20
        $region19: #{tpu_custom_call.1} parent=11 // pred_region
          _
        $region20: #{tpu_custom_call.1} parent=11 // pred_fallthru
          _
        // Predicated region
        $region21: #{tpu_custom_call.1} parent=11 // pred_check
          %p437 = pneg %p117
        $region22: #{tpu_custom_call.1} parent=11 // pred_check_branch
          %439 = sbr.rel (%p437) target = $region24
        $region23: #{tpu_custom_call.1} parent=11 // pred_region
          _
        $region24: #{tpu_custom_call.1} parent=11 // pred_fallthru
          _
        // Predicated region
        $region25: #{tpu_custom_call.1} parent=11 // pred_check
          %p440 = pneg %p138
        $region26: #{tpu_custom_call.1} parent=11 // pred_check_branch
          %442 = sbr.rel (%p440) target = $region28
        $region27: #{tpu_custom_call.1} parent=11 // pred_region
          _
        $region28: #{tpu_custom_call.1} parent=11 // pred_fallthru
          _
        // Predicated region
        $region29: #{tpu_custom_call.1} parent=11 // pred_check
          %p443 = pneg %p159
        $region30: #{tpu_custom_call.1} parent=11 // pred_check_branch
          %445 = sbr.rel (%p443) target = $region32
        $region31: #{tpu_custom_call.1} parent=11 // pred_region
          _
        $region32: #{tpu_custom_call.1} parent=11 // pred_fallthru
          _
        // Predicated region
        $region33: #{tpu_custom_call.1} parent=11 // pred_check
          %p446 = pneg %p180
        $region34: #{tpu_custom_call.1} parent=11 // pred_check_branch
          %448 = sbr.rel (%p446) target = $region36
        $region35: #{tpu_custom_call.1} parent=11 // pred_region
          %s450 = ssub.s32 16, 16
          %451 = vsyncadd [#allocation3], %s450
          %s453 = sshll.u32 [#allocation2], 4
          %s454 = int_to_ptr.vmem [resolvable:$true] %s453
          %456 = dma.hbm_to_vmem [thread:$0]  %s6, 16, %s454, [#allocation3]
        $region36: #{tpu_custom_call.1} parent=11 // pred_fallthru
          _
        // Predicated region
        $region37: #{tpu_custom_call.1} parent=11 // pred_check
          %p457 = pneg %p201
        $region38: #{tpu_custom_call.1} parent=11 // pred_check_branch
          %459 = sbr.rel (%p457) target = $region40
        $region39: #{tpu_custom_call.1} parent=11 // pred_region
          %s461 = ssub.s32 16, 16
          %462 = vsyncadd [#allocation6], %s461
          %s464 = sshll.u32 [#allocation5], 4
          %s465 = int_to_ptr.vmem [resolvable:$true] %s464
          %467 = dma.hbm_to_vmem [thread:$0]  %s7, 16, %s465, [#allocation6]
        $region40: #{tpu_custom_call.1} parent=11 // pred_fallthru
          _
        // Predicated region
        $region41: #{tpu_custom_call.1} parent=11 // pred_check
          %p468 = pneg %p222
        $region42: #{tpu_custom_call.1} parent=11 // pred_check_branch
          %470 = sbr.rel (%p468) target = $region44
        $region43: #{tpu_custom_call.1} parent=11 // pred_region
          %s472 = ssub.s32 16, 16
          %473 = vsyncadd [#allocation6], %s472
          %s475 = sshll.u32 [#allocation7], 4
          %s476 = int_to_ptr.vmem [resolvable:$true] %s475
          %478 = dma.hbm_to_vmem [thread:$0]  %s8, 16, %s476, [#allocation6]
        $region44: #{tpu_custom_call.1} parent=11 // pred_fallthru
          _
        // Predicated region
        $region45: #{tpu_custom_call.1} parent=11 // pred_check
          %p479 = pneg %p243
        $region46: #{tpu_custom_call.1} parent=11 // pred_check_branch
          %481 = sbr.rel (%p479) target = $region48
        $region47: #{tpu_custom_call.1} parent=11 // pred_region
          _
        $region48: #{tpu_custom_call.1} parent=11 // pred_fallthru
          _
        // Predicated region
        $region49: #{tpu_custom_call.1} parent=11 // pred_check
          %p482 = pneg %p264
        $region50: #{tpu_custom_call.1} parent=11 // pred_check_branch
          %484 = sbr.rel (%p482) target = $region52
        $region51: #{tpu_custom_call.1} parent=11 // pred_region
          _
        $region52: #{tpu_custom_call.1} parent=11 // pred_fallthru
          _
        // Predicated region
        $region53: #{tpu_custom_call.1} parent=11 // pred_check
          %p485 = pneg %p285
        $region54: #{tpu_custom_call.1} parent=11 // pred_check_branch
          %487 = sbr.rel (%p485) target = $region56
        $region55: #{tpu_custom_call.1} parent=11 // pred_region
          _
        $region56: #{tpu_custom_call.1} parent=11 // pred_fallthru
          _
        // Predicated region
        $region57: #{tpu_custom_call.1} parent=11 // pred_check
          %p488 = pneg %p306
        $region58: #{tpu_custom_call.1} parent=11 // pred_check_branch
          %490 = sbr.rel (%p488) target = $region60
        $region59: #{tpu_custom_call.1} parent=11 // pred_region
          _
        $region60: #{tpu_custom_call.1} parent=11 // pred_fallthru
          _
        // Predicated region
        $region61: #{tpu_custom_call.1} parent=11 // pred_check
          %p491 = pneg %p327
        $region62: #{tpu_custom_call.1} parent=11 // pred_check_branch
          %493 = sbr.rel (%p491) target = $region64
        $region63: #{tpu_custom_call.1} parent=11 // pred_region
          _
        $region64: #{tpu_custom_call.1} parent=11 // pred_fallthru
          _
        // Predicated region
        $region65: #{tpu_custom_call.1} parent=11 // pred_check
          %p494 = pneg %p348
        $region66: #{tpu_custom_call.1} parent=11 // pred_check_branch
          %496 = sbr.rel (%p494) target = $region68
        $region67: #{tpu_custom_call.1} parent=11 // pred_region
          _
        $region68: #{tpu_custom_call.1} parent=11 // pred_fallthru
          _
        // Predicated region
        $region69: #{tpu_custom_call.1} parent=11 // pred_check
          %p497 = pneg %p369
        $region70: #{tpu_custom_call.1} parent=11 // pred_check_branch
          %499 = sbr.rel (%p497) target = $region72
        $region71: #{tpu_custom_call.1} parent=11 // pred_region
          _
        $region72: #{tpu_custom_call.1} parent=11 // pred_fallthru
          _
        // Predicated region
        $region73: #{tpu_custom_call.1} parent=11 // pred_check
          %p500 = pneg %p390
        $region74: #{tpu_custom_call.1} parent=11 // pred_check_branch
          %502 = sbr.rel (%p500) target = $region76
        $region75: #{tpu_custom_call.1} parent=11 // pred_region
          _
        $region76: #{tpu_custom_call.1} parent=11 // pred_fallthru
          _
      $region12: #{tpu_custom_call.1} parent=5 // pred_fallthru
        _
      %p503 = scmp.lt.s32.totalorder %s28, 2
      // Predicated region
      $region77: #{tpu_custom_call.1} parent=5 // pred_check
        %p504 = pneg %p503
      $region78: #{tpu_custom_call.1} parent=5 // pred_check_branch
        %506 = sbr.rel (%p504) target = $region80
      $region79: #{tpu_custom_call.1} parent=5 // pred_region
        // Predicated region
        $region81: #{tpu_custom_call.1} parent=79 // pred_check
          %p507 = pneg %p48
        $region82: #{tpu_custom_call.1} parent=79 // pred_check_branch
          %509 = sbr.rel (%p507) target = $region84
        $region83: #{tpu_custom_call.1} parent=79 // pred_region
          %p510 = scmp.lt.s32.totalorder %s28, 1
          %s511 = scalar_select %p510, %s28, 1
          %s512 = smul.addr %s511, 8
          %s513 = scalar_lea.vmem %s0, %s512
        $region84: #{tpu_custom_call.1} parent=79 // pred_fallthru
          _
      $region80: #{tpu_custom_call.1} parent=5 // pred_fallthru
        _
      %p514 = scmp.le.s32.totalorder 1, %s28
      %p515 = scmp.lt.s32.totalorder %s28, 3
      %p516 = pnand %p514, %p515
      %p517 = pneg %p516
      // Predicated region
      $region85: #{tpu_custom_call.1} parent=5 // pred_check
        _
      $region86: #{tpu_custom_call.1} parent=5 // pred_check_branch
        %519 = sbr.rel (%p516) target = $region88
      $region87: #{tpu_custom_call.1} parent=5 // pred_region
        %s520 = ssub.s32 %s28, 1
        // Predicated region
        $region89: #{tpu_custom_call.1} parent=87 // pred_check
          %p521 = pneg %p180
        $region90: #{tpu_custom_call.1} parent=87 // pred_check_branch
          %523 = sbr.rel (%p521) target = $region92
        $region91: #{tpu_custom_call.1} parent=87 // pred_region
          %524 = dma.done [#allocation3], 16
        $region92: #{tpu_custom_call.1} parent=87 // pred_fallthru
          _
        // Predicated region
        $region93: #{tpu_custom_call.1} parent=87 // pred_check
          %p525 = pneg %p201
        $region94: #{tpu_custom_call.1} parent=87 // pred_check_branch
          %527 = sbr.rel (%p525) target = $region96
        $region95: #{tpu_custom_call.1} parent=87 // pred_region
          %528 = dma.done [#allocation6], 16
        $region96: #{tpu_custom_call.1} parent=87 // pred_fallthru
          _
        // Predicated region
        $region97: #{tpu_custom_call.1} parent=87 // pred_check
          %p529 = pneg %p222
        $region98: #{tpu_custom_call.1} parent=87 // pred_check_branch
          %531 = sbr.rel (%p529) target = $region100
        $region99: #{tpu_custom_call.1} parent=87 // pred_region
          %532 = dma.done [#allocation6], 16
        $region100: #{tpu_custom_call.1} parent=87 // pred_fallthru
          _
        %p533 = scmp.lt.s32.totalorder %s33, 1
        %s534 = scalar_select %p533, %s33, 1
        %s535 = smul.addr %s534, 8
        %s536 = scalar_lea.vmem %s0, %s535
        %p537 = pneg %p54
        %p538 = pneg %p51
        %p539 = pneg %p75
        %p540 = pneg %p72
        %p541 = pneg %p96
        %p542 = pneg %p93
        %p543 = pneg %p117
        %p544 = pneg %p114
        %p545 = pneg %p138
        %p546 = pneg %p135
        %p547 = pneg %p159
        %p548 = pneg %p156
        %p549 = pneg %p180
        %p550 = pneg %p177
        %p551 = pneg %p201
        %p552 = pneg %p198
        %p553 = pneg %p222
        %p554 = pneg %p219
        %p555 = pneg %p243
        %p556 = pneg %p240
        %p557 = pneg %p264
        %p558 = pneg %p261
        %p559 = pneg %p285
        %p560 = pneg %p282
        %p561 = pneg %p306
        %p562 = pneg %p303
        %p563 = pneg %p327
        %p564 = pneg %p324
        %p565 = pneg %p348
        %p566 = pneg %p345
        %p567 = pneg %p369
        %p568 = pneg %p366
        %p569 = pneg %p390
        %p570 = pneg %p387
        %p571 = pneg %p416
        %p572 = pneg %p413
        %s573 = sand.u32 %s403, 1
        %s574 = scalar_lea.sflag [#allocation4], %s573
        %s575 = sand.u32 %s403, 1
        %s576 = smul.addr %s575, 8
        %s577 = scalar_lea.vmem [#allocation8], %s576
        %p578 = scmp.lt.s32.totalorder %s33, 1
        %s579 = scalar_select %p578, %s33, 1
        %s580 = smul.addr %s579, 8
        %s581 = scalar_lea.vmem %s0, %s580
        %v583 = vld [vmem:[%s581] sm:$0xff]
        %v584 = vld [vmem:[%s1] sm:$0x1]
        %v585 = vld [vmem:[%s2] sm:$0x1]
        %vm586 = vcmask 261120
        %v587 = vsel %vm586, %v583, 0.0
        %588 = vadd.xlane.f32.xlu0 %v587
        %v589 = vpop.xlane.xlu0 %588
        %v590 = vrcp.pop 32.0
        %v591 = vmul.f32 %v589, %v590
        %v592 = vsub.f32 %v583, %v591
        %v593 = vmul.f32 %v592, %v592
        %v594 = vsel %vm586, %v593, 0.0
        %595 = vadd.xlane.f32.xlu0 %v594
        %v596 = vpop.xlane.xlu0 %595
        %v597 = vmul.f32 %v596, %v590
        %v598 = vadd.f32 %v597, 1e-06
        %v599 = vrsqrt.pop %v598
        %v600 = vmul.f32 %v592, %v599
        %v602 = vlaneseq
        %v603 = vshrl.u32 %v602, 7
        %v604 = vsub.s32 0, %v603
        %v605 = vrot.slane %v584, %v604
        %v607 = vmul.f32 %v600, %v605
        %v609 = vlaneseq
        %v610 = vshrl.u32 %v609, 7
        %v611 = vsub.s32 0, %v610
        %v612 = vrot.slane %v585, %v611
        %v614 = vadd.f32 %v607, %v612
        %v615 = vpack.c.bf16 %v614, %v614
        %v616 = vld [vmem:[%s3] sm:$0xf]
        %v617 = vld [vmem:[%s3 + $0x4] sm:$0xf]
        %v618 = vld [vmem:[%s3 + $0x8] sm:$0xf]
        %v619 = vld [vmem:[%s3 + $0xc] sm:$0xf]
        %v620 = vld [vmem:[#allocation2] sm:$0x1]
        %v622 = vlaneseq
        %v623 = vshrl.u32 %v622, 7
        %v624 = vsub.s32 0, %v623
        %v625 = vrot.slane %v620, %v624
        %v631 = vunpack.c.l.b16 %v616
        %v632 = vunpack.c.l.b16 %v617
        %v633 = vunpack.c.l.b16 %v618
        %v634 = vunpack.c.l.b16 %v619
        %v635 = vpack.c.b16 %v632, %v631
        %v636 = vpack.c.b16 %v634, %v633
        %v640 = vsel %vm586, %v615, 0
        %642 = vmatprep.subr.bf16.mxu0 0
        %643 = vmatpush1.bf16.msra.mxu0 %v635
        %644 = vmatprep.subr.bf16.mxu0 0
        %645 = vmatpush1.bf16.msra.mxu0 %v636
        %646 = vmatprep.subr.bf16.mxu0 0
        %647 = vmatpush1.bf16.msra.mxu0 0
        %648 = vmatprep.subr.bf16.mxu0 0
        %649 = vmatpush1.bf16.msra.mxu0 0
        %650 = vmatprep.subr.bf16.mxu0 0
        %651 = vmatpush1.bf16.msra.mxu0 0
        %652 = vmatprep.subr.bf16.mxu0 0
        %653 = vmatpush1.bf16.msra.mxu0 0
        %654 = vmatprep.subr.bf16.mxu0 0
        %655 = vmatpush1.bf16.msra.mxu0 0
        %656 = vmatprep.subr.bf16.mxu0 0
        %657 = vmatpush1.bf16.msra.mxu0 0
        %658 = vmatprep.subr.bf16.mxu0 0
        %659 = vmatpush1.bf16.msra.mxu0 0
        %660 = vmatprep.subr.bf16.mxu0 0
        %661 = vmatpush1.bf16.msra.mxu0 0
        %662 = vmatprep.subr.bf16.mxu0 0
        %663 = vmatpush1.bf16.msra.mxu0 0
        %664 = vmatprep.subr.bf16.mxu0 0
        %665 = vmatpush1.bf16.msra.mxu0 0
        %666 = vmatprep.subr.bf16.mxu0 0
        %667 = vmatpush1.bf16.msra.mxu0 0
        %668 = vmatprep.subr.bf16.mxu0 0
        %669 = vmatpush1.bf16.msra.mxu0 0
        %670 = vmatprep.subr.bf16.mxu0 0
        %671 = vmatpush1.bf16.msra.mxu0 0
        %672 = vmatprep.subr.bf16.mxu0 0
        %673 = vmatpush1.bf16.msra.mxu0 0
        %674 = vmatprep.mubr.bf16.mxu0 0
        %675 = vmatmul.mubr.bf16.gmra.mrb[0].mxu0 %v640
        %v676 = vpop.f32.mrb[0].mxu0
        %v677 = vadd.f32 %v625, %v676
        %v678 = vpop.f32.mrb[0].mxu0
        %v679 = vpop.f32.mrb[0].mxu0
        %v680 = vpop.f32.mrb[0].mxu0
        %681 = vdwg.mxu0
        %v682 = vld [vmem:[%s4] sm:$0xf]
        %v683 = vld [vmem:[%s4 + $0x4] sm:$0xf]
        %v684 = vld [vmem:[%s4 + $0x8] sm:$0xf]
        %v685 = vld [vmem:[%s4 + $0xc] sm:$0xf]
        %v686 = vld [vmem:[#allocation5] sm:$0x1]
        %v688 = vlaneseq
        %v689 = vshrl.u32 %v688, 7
        %v690 = vsub.s32 0, %v689
        %v691 = vrot.slane %v686, %v690
        %v697 = vunpack.c.l.b16 %v682
        %v698 = vunpack.c.l.b16 %v683
        %v699 = vunpack.c.l.b16 %v684
        %v700 = vunpack.c.l.b16 %v685
        %v701 = vpack.c.b16 %v698, %v697
        %v702 = vpack.c.b16 %v700, %v699
        %705 = vmatprep.subr.bf16.mxu0 0
        %706 = vmatpush1.bf16.msra.mxu0 %v701
        %707 = vmatprep.subr.bf16.mxu0 0
        %708 = vmatpush1.bf16.msra.mxu0 %v702
        %709 = vmatprep.subr.bf16.mxu0 0
        %710 = vmatpush1.bf16.msra.mxu0 0
        %711 = vmatprep.subr.bf16.mxu0 0
        %712 = vmatpush1.bf16.msra.mxu0 0
        %713 = vmatprep.subr.bf16.mxu0 0
        %714 = vmatpush1.bf16.msra.mxu0 0
        %715 = vmatprep.subr.bf16.mxu0 0
        %716 = vmatpush1.bf16.msra.mxu0 0
        %717 = vmatprep.subr.bf16.mxu0 0
        %718 = vmatpush1.bf16.msra.mxu0 0
        %719 = vmatprep.subr.bf16.mxu0 0
        %720 = vmatpush1.bf16.msra.mxu0 0
        %721 = vmatprep.subr.bf16.mxu0 0
        %722 = vmatpush1.bf16.msra.mxu0 0
        %723 = vmatprep.subr.bf16.mxu0 0
        %724 = vmatpush1.bf16.msra.mxu0 0
        %725 = vmatprep.subr.bf16.mxu0 0
        %726 = vmatpush1.bf16.msra.mxu0 0
        %727 = vmatprep.subr.bf16.mxu0 0
        %728 = vmatpush1.bf16.msra.mxu0 0
        %729 = vmatprep.subr.bf16.mxu0 0
        %730 = vmatpush1.bf16.msra.mxu0 0
        %731 = vmatprep.subr.bf16.mxu0 0
        %732 = vmatpush1.bf16.msra.mxu0 0
        %733 = vmatprep.subr.bf16.mxu0 0
        %734 = vmatpush1.bf16.msra.mxu0 0
        %735 = vmatprep.subr.bf16.mxu0 0
        %736 = vmatpush1.bf16.msra.mxu0 0
        %737 = vmatprep.mubr.bf16.mxu0 0
        %738 = vmatmul.mubr.bf16.gmra.mrb[0].mxu0 %v640
        %v739 = vpop.f32.mrb[0].mxu0
        %v740 = vadd.f32 %v691, %v739
        %v741 = vpop.f32.mrb[0].mxu0
        %v742 = vpop.f32.mrb[0].mxu0
        %v743 = vpop.f32.mrb[0].mxu0
        %744 = vdwg.mxu0
        %v745 = vld [vmem:[%s5] sm:$0xf]
        %v746 = vld [vmem:[%s5 + $0x4] sm:$0xf]
        %v747 = vld [vmem:[%s5 + $0x8] sm:$0xf]
        %v748 = vld [vmem:[%s5 + $0xc] sm:$0xf]
        %v749 = vld [vmem:[#allocation7] sm:$0x1]
        %v751 = vlaneseq
        %v752 = vshrl.u32 %v751, 7
        %v753 = vsub.s32 0, %v752
        %v754 = vrot.slane %v749, %v753
        %v760 = vunpack.c.l.b16 %v745
        %v761 = vunpack.c.l.b16 %v746
        %v762 = vunpack.c.l.b16 %v747
        %v763 = vunpack.c.l.b16 %v748
        %v764 = vpack.c.b16 %v761, %v760
        %v765 = vpack.c.b16 %v763, %v762
        %768 = vmatprep.subr.bf16.mxu0 0
        %769 = vmatpush1.bf16.msra.mxu0 %v764
        %770 = vmatprep.subr.bf16.mxu0 0
        %771 = vmatpush1.bf16.msra.mxu0 %v765
        %772 = vmatprep.subr.bf16.mxu0 0
        %773 = vmatpush1.bf16.msra.mxu0 0
        %774 = vmatprep.subr.bf16.mxu0 0
        %775 = vmatpush1.bf16.msra.mxu0 0
        %776 = vmatprep.subr.bf16.mxu0 0
        %777 = vmatpush1.bf16.msra.mxu0 0
        %778 = vmatprep.subr.bf16.mxu0 0
        %779 = vmatpush1.bf16.msra.mxu0 0
        %780 = vmatprep.subr.bf16.mxu0 0
        %781 = vmatpush1.bf16.msra.mxu0 0
        %782 = vmatprep.subr.bf16.mxu0 0
        %783 = vmatpush1.bf16.msra.mxu0 0
        %784 = vmatprep.subr.bf16.mxu0 0
        %785 = vmatpush1.bf16.msra.mxu0 0
        %786 = vmatprep.subr.bf16.mxu0 0
        %787 = vmatpush1.bf16.msra.mxu0 0
        %788 = vmatprep.subr.bf16.mxu0 0
        %789 = vmatpush1.bf16.msra.mxu0 0
        %790 = vmatprep.subr.bf16.mxu0 0
        %791 = vmatpush1.bf16.msra.mxu0 0
        %792 = vmatprep.subr.bf16.mxu0 0
        %793 = vmatpush1.bf16.msra.mxu0 0
        %794 = vmatprep.subr.bf16.mxu0 0
        %795 = vmatpush1.bf16.msra.mxu0 0
        %796 = vmatprep.subr.bf16.mxu0 0
        %797 = vmatpush1.bf16.msra.mxu0 0
        %798 = vmatprep.subr.bf16.mxu0 0
        %799 = vmatpush1.bf16.msra.mxu0 0
        %800 = vmatprep.mubr.bf16.mxu0 0
        %801 = vmatmul.mubr.bf16.gmra.mrb[0].mxu0 %v640
        %v802 = vpop.f32.mrb[0].mxu0
        %v803 = vadd.f32 %v754, %v802
        %v804 = vpop.f32.mrb[0].mxu0
        %v805 = vpop.f32.mrb[0].mxu0
        %v806 = vpop.f32.mrb[0].mxu0
        %807 = vdwg.mxu0
        %v808 = vpack.c.bf16 %v677, %v677
        %v809 = vpack.c.bf16 %v740, %v740
        %v810 = vpack.c.bf16 %v803, %v803
        %vm811 = vcmask 64512
        %v813 = vsel %vm811, %v808, 0
        %v816 = vsel %vm811, %v809, 0
        %818 = vmatprep.subr.bf16.mxu0 0
        %819 = vmatpush1.bf16.xpose.msra.mxu0 %v816
        %820 = vmatprep.subr.bf16.mxu0 0
        %821 = vmatpush1.bf16.xpose.msra.mxu0 0
        %822 = vmatprep.subr.bf16.mxu0 0
        %823 = vmatpush1.bf16.xpose.msra.mxu0 0
        %824 = vmatprep.subr.bf16.mxu0 0
        %825 = vmatpush1.bf16.xpose.msra.mxu0 0
        %826 = vmatprep.subr.bf16.mxu0 0
        %827 = vmatpush1.bf16.xpose.msra.mxu0 0
        %828 = vmatprep.subr.bf16.mxu0 0
        %829 = vmatpush1.bf16.xpose.msra.mxu0 0
        %830 = vmatprep.subr.bf16.mxu0 0
        %831 = vmatpush1.bf16.xpose.msra.mxu0 0
        %832 = vmatprep.subr.bf16.mxu0 0
        %833 = vmatpush1.bf16.xpose.msra.mxu0 0
        %834 = vmatprep.subr.bf16.mxu0 0
        %835 = vmatpush1.bf16.xpose.msra.mxu0 0
        %836 = vmatprep.subr.bf16.mxu0 0
        %837 = vmatpush1.bf16.xpose.msra.mxu0 0
        %838 = vmatprep.subr.bf16.mxu0 0
        %839 = vmatpush1.bf16.xpose.msra.mxu0 0
        %840 = vmatprep.subr.bf16.mxu0 0
        %841 = vmatpush1.bf16.xpose.msra.mxu0 0
        %842 = vmatprep.subr.bf16.mxu0 0
        %843 = vmatpush1.bf16.xpose.msra.mxu0 0
        %844 = vmatprep.subr.bf16.mxu0 0
        %845 = vmatpush1.bf16.xpose.msra.mxu0 0
        %846 = vmatprep.subr.bf16.mxu0 0
        %847 = vmatpush1.bf16.xpose.msra.mxu0 0
        %848 = vmatprep.subr.bf16.mxu0 0
        %849 = vmatpush1.bf16.xpose.msra.mxu0 0
        %850 = vmatprep.mubr.bf16.mxu0 0
        %851 = vmatmul.mubr.bf16.gmra.mrb[0].mxu0 %v813
        %v852 = vpop.f32.mrb[0].mxu0
        %v853 = vadd.f32 0.0, %v852
        %v854 = vpop.f32.mrb[0].mxu0
        %v855 = vpop.f32.mrb[0].mxu0
        %v856 = vpop.f32.mrb[0].mxu0
        %857 = vdwg.mxu0
        %v858 = vsel %vm811, %v853, -inf
        %859 = vmax.xlane.f32.xlu0 %v858
        %v860 = vpop.xlane.xlu0 %859
        %v861 = vsub.f32 %v853, %v860
        %v862 = vmul.f32 %v861, 1.442695
        %v863 = vpow.pop %v862
        %v864 = vsel %vm811, %v863, 0.0
        %865 = vadd.xlane.f32.xlu0 %v864
        %v866 = vpop.xlane.xlu0 %865
        %v867 = vrcp.pop %v866
        %v868 = vmul.f32 %v863, %v867
        %v869 = vpack.c.bf16 %v868, %v868
        %v871 = vsel %vm811, %v869, 0
        %vm873 = vcmask 1043456
        %v875 = vsel %vm873, %v810, 0
        %877 = vmatprep.subr.bf16.mxu0 0
        %878 = vmatpush1.bf16.msra.mxu0 %v875
        %879 = vmatprep.subr.bf16.mxu0 0
        %880 = vmatpush1.bf16.msra.mxu0 0
        %881 = vmatprep.subr.bf16.mxu0 0
        %882 = vmatpush1.bf16.msra.mxu0 0
        %883 = vmatprep.subr.bf16.mxu0 0
        %884 = vmatpush1.bf16.msra.mxu0 0
        %885 = vmatprep.subr.bf16.mxu0 0
        %886 = vmatpush1.bf16.msra.mxu0 0
        %887 = vmatprep.subr.bf16.mxu0 0
        %888 = vmatpush1.bf16.msra.mxu0 0
        %889 = vmatprep.subr.bf16.mxu0 0
        %890 = vmatpush1.bf16.msra.mxu0 0
        %891 = vmatprep.subr.bf16.mxu0 0
        %892 = vmatpush1.bf16.msra.mxu0 0
        %893 = vmatprep.subr.bf16.mxu0 0
        %894 = vmatpush1.bf16.msra.mxu0 0
        %895 = vmatprep.subr.bf16.mxu0 0
        %896 = vmatpush1.bf16.msra.mxu0 0
        %897 = vmatprep.subr.bf16.mxu0 0
        %898 = vmatpush1.bf16.msra.mxu0 0
        %899 = vmatprep.subr.bf16.mxu0 0
        %900 = vmatpush1.bf16.msra.mxu0 0
        %901 = vmatprep.subr.bf16.mxu0 0
        %902 = vmatpush1.bf16.msra.mxu0 0
        %903 = vmatprep.subr.bf16.mxu0 0
        %904 = vmatpush1.bf16.msra.mxu0 0
        %905 = vmatprep.subr.bf16.mxu0 0
        %906 = vmatpush1.bf16.msra.mxu0 0
        %907 = vmatprep.subr.bf16.mxu0 0
        %908 = vmatpush1.bf16.msra.mxu0 0
        %909 = vmatprep.mubr.bf16.mxu0 0
        %910 = vmatmul.mubr.bf16.gmra.mrb[0].mxu0 %v871
        %v911 = vpop.f32.mrb[0].mxu0
        %v912 = vadd.f32 0.0, %v911
        %v913 = vpop.f32.mrb[0].mxu0
        %v914 = vpop.f32.mrb[0].mxu0
        %v915 = vpop.f32.mrb[0].mxu0
        %916 = vdwg.mxu0
        %v917 = vpack.c.bf16 %v912, %v912
        %v918 = vld [vmem:[%s9] sm:$0xf]
        %920 = vrot.lane.b32.xlu0 %v808, 120
        %v921 = vpop.permute.xlu0 %920
        %923 = vrot.lane.b32.xlu0 %v809, 120
        %v924 = vpop.permute.xlu0 %923
        %v926 = vsel %vm811, %v921, 0
        %v929 = vsel %vm811, %v924, 0
        %931 = vmatprep.subr.bf16.mxu0 0
        %932 = vmatpush1.bf16.xpose.msra.mxu0 %v929
        %933 = vmatprep.subr.bf16.mxu0 0
        %934 = vmatpush1.bf16.xpose.msra.mxu0 0
        %935 = vmatprep.subr.bf16.mxu0 0
        %936 = vmatpush1.bf16.xpose.msra.mxu0 0
        %937 = vmatprep.subr.bf16.mxu0 0
        %938 = vmatpush1.bf16.xpose.msra.mxu0 0
        %939 = vmatprep.subr.bf16.mxu0 0
        %940 = vmatpush1.bf16.xpose.msra.mxu0 0
        %941 = vmatprep.subr.bf16.mxu0 0
        %942 = vmatpush1.bf16.xpose.msra.mxu0 0
        %943 = vmatprep.subr.bf16.mxu0 0
        %944 = vmatpush1.bf16.xpose.msra.mxu0 0
        %945 = vmatprep.subr.bf16.mxu0 0
        %946 = vmatpush1.bf16.xpose.msra.mxu0 0
        %947 = vmatprep.subr.bf16.mxu0 0
        %948 = vmatpush1.bf16.xpose.msra.mxu0 0
        %949 = vmatprep.subr.bf16.mxu0 0
        %950 = vmatpush1.bf16.xpose.msra.mxu0 0
        %951 = vmatprep.subr.bf16.mxu0 0
        %952 = vmatpush1.bf16.xpose.msra.mxu0 0
        %953 = vmatprep.subr.bf16.mxu0 0
        %954 = vmatpush1.bf16.xpose.msra.mxu0 0
        %955 = vmatprep.subr.bf16.mxu0 0
        %956 = vmatpush1.bf16.xpose.msra.mxu0 0
        %957 = vmatprep.subr.bf16.mxu0 0
        %958 = vmatpush1.bf16.xpose.msra.mxu0 0
        %959 = vmatprep.subr.bf16.mxu0 0
        %960 = vmatpush1.bf16.xpose.msra.mxu0 0
        %961 = vmatprep.subr.bf16.mxu0 0
        %962 = vmatpush1.bf16.xpose.msra.mxu0 0
        %963 = vmatprep.mubr.bf16.mxu0 0
        %964 = vmatmul.mubr.bf16.gmra.mrb[0].mxu0 %v926
        %v965 = vpop.f32.mrb[0].mxu0
        %v966 = vadd.f32 0.0, %v965
        %v967 = vpop.f32.mrb[0].mxu0
        %v968 = vpop.f32.mrb[0].mxu0
        %v969 = vpop.f32.mrb[0].mxu0
        %970 = vdwg.mxu0
        %v971 = vsel %vm811, %v966, -inf
        %972 = vmax.xlane.f32.xlu0 %v971
        %v973 = vpop.xlane.xlu0 %972
        %v974 = vsub.f32 %v966, %v973
        %v975 = vmul.f32 %v974, 1.442695
        %v976 = vpow.pop %v975
        %v977 = vsel %vm811, %v976, 0.0
        %978 = vadd.xlane.f32.xlu0 %v977
        %v979 = vpop.xlane.xlu0 %978
        %v980 = vrcp.pop %v979
        %v981 = vmul.f32 %v976, %v980
        %v982 = vpack.c.bf16 %v981, %v981
        %984 = vrot.lane.b32.xlu0 %v810, 120
        %v985 = vpop.permute.xlu0 %984
        %v987 = vsel %vm811, %v982, 0
        %v990 = vsel %vm873, %v985, 0
        %992 = vmatprep.subr.bf16.mxu0 0
        %993 = vmatpush1.bf16.msra.mxu0 %v990
        %994 = vmatprep.subr.bf16.mxu0 0
        %995 = vmatpush1.bf16.msra.mxu0 0
        %996 = vmatprep.subr.bf16.mxu0 0
        %997 = vmatpush1.bf16.msra.mxu0 0
        %998 = vmatprep.subr.bf16.mxu0 0
        %999 = vmatpush1.bf16.msra.mxu0 0
        %1000 = vmatprep.subr.bf16.mxu0 0
        %1001 = vmatpush1.bf16.msra.mxu0 0
        %1002 = vmatprep.subr.bf16.mxu0 0
        %1003 = vmatpush1.bf16.msra.mxu0 0
        %1004 = vmatprep.subr.bf16.mxu0 0
        %1005 = vmatpush1.bf16.msra.mxu0 0
        %1006 = vmatprep.subr.bf16.mxu0 0
        %1007 = vmatpush1.bf16.msra.mxu0 0
        %1008 = vmatprep.subr.bf16.mxu0 0
        %1009 = vmatpush1.bf16.msra.mxu0 0
        %1010 = vmatprep.subr.bf16.mxu0 0
        %1011 = vmatpush1.bf16.msra.mxu0 0
        %1012 = vmatprep.subr.bf16.mxu0 0
        %1013 = vmatpush1.bf16.msra.mxu0 0
        %1014 = vmatprep.subr.bf16.mxu0 0
        %1015 = vmatpush1.bf16.msra.mxu0 0
        %1016 = vmatprep.subr.bf16.mxu0 0
        %1017 = vmatpush1.bf16.msra.mxu0 0
        %1018 = vmatprep.subr.bf16.mxu0 0
        %1019 = vmatpush1.bf16.msra.mxu0 0
        %1020 = vmatprep.subr.bf16.mxu0 0
        %1021 = vmatpush1.bf16.msra.mxu0 0
        %1022 = vmatprep.subr.bf16.mxu0 0
        %1023 = vmatpush1.bf16.msra.mxu0 0
        %1024 = vmatprep.mubr.bf16.mxu0 0
        %1025 = vmatmul.mubr.bf16.gmra.mrb[0].mxu0 %v987
        %v1026 = vpop.f32.mrb[0].mxu0
        %v1027 = vadd.f32 0.0, %v1026
        %v1028 = vpop.f32.mrb[0].mxu0
        %v1029 = vpop.f32.mrb[0].mxu0
        %v1030 = vpop.f32.mrb[0].mxu0
        %1031 = vdwg.mxu0
        %v1032 = vpack.c.bf16 %v1027, %v1027
        %s1033 = scalar_lea.vmem %s9, 4
        %v1034 = vld [vmem:[%s1033] sm:$0xf]
        %v1036 = vsel %vm811, %v1032, 0
        %v1039 = vsel %vm873, %v1034, 0
        %1041 = vmatprep.subr.bf16.mxu0 0
        %1042 = vmatpush1.bf16.msra.mxu0 %v1039
        %1043 = vmatprep.subr.bf16.mxu0 0
        %1044 = vmatpush1.bf16.msra.mxu0 0
        %1045 = vmatprep.subr.bf16.mxu0 0
        %1046 = vmatpush1.bf16.msra.mxu0 0
        %1047 = vmatprep.subr.bf16.mxu0 0
        %1048 = vmatpush1.bf16.msra.mxu0 0
        %1049 = vmatprep.subr.bf16.mxu0 0
        %1050 = vmatpush1.bf16.msra.mxu0 0
        %1051 = vmatprep.subr.bf16.mxu0 0
        %1052 = vmatpush1.bf16.msra.mxu0 0
        %1053 = vmatprep.subr.bf16.mxu0 0
        %1054 = vmatpush1.bf16.msra.mxu0 0
        %1055 = vmatprep.subr.bf16.mxu0 0
        %1056 = vmatpush1.bf16.msra.mxu0 0
        %1057 = vmatprep.subr.bf16.mxu0 0
        %1058 = vmatpush1.bf16.msra.mxu0 0
        %1059 = vmatprep.subr.bf16.mxu0 0
        %1060 = vmatpush1.bf16.msra.mxu0 0
        %1061 = vmatprep.subr.bf16.mxu0 0
        %1062 = vmatpush1.bf16.msra.mxu0 0
        %1063 = vmatprep.subr.bf16.mxu0 0
        %1064 = vmatpush1.bf16.msra.mxu0 0
        %1065 = vmatprep.subr.bf16.mxu0 0
        %1066 = vmatpush1.bf16.msra.mxu0 0
        %1067 = vmatprep.subr.bf16.mxu0 0
        %1068 = vmatpush1.bf16.msra.mxu0 0
        %1069 = vmatprep.subr.bf16.mxu0 0
        %1070 = vmatpush1.bf16.msra.mxu0 0
        %1071 = vmatprep.subr.bf16.mxu0 0
        %1072 = vmatpush1.bf16.msra.mxu0 0
        %1073 = vmatprep.mubr.bf16.mxu0 0
        %1074 = vmatmul.mubr.bf16.gmra.mrb[0].mxu0 %v1036
        %v1075 = vpop.f32.mrb[0].mxu0
        %v1076 = vadd.f32 0.0, %v1075
        %v1077 = vpop.f32.mrb[0].mxu0
        %v1078 = vpop.f32.mrb[0].mxu0
        %v1079 = vpop.f32.mrb[0].mxu0
        %1080 = vdwg.mxu0
        %v1082 = vsel %vm811, %v917, 0
        %v1085 = vsel %vm873, %v918, 0
        %1087 = vmatprep.subr.bf16.mxu0 0
        %1088 = vmatpush1.bf16.msra.mxu0 %v1085
        %1089 = vmatprep.subr.bf16.mxu0 0
        %1090 = vmatpush1.bf16.msra.mxu0 0
        %1091 = vmatprep.subr.bf16.mxu0 0
        %1092 = vmatpush1.bf16.msra.mxu0 0
        %1093 = vmatprep.subr.bf16.mxu0 0
        %1094 = vmatpush1.bf16.msra.mxu0 0
        %1095 = vmatprep.subr.bf16.mxu0 0
        %1096 = vmatpush1.bf16.msra.mxu0 0
        %1097 = vmatprep.subr.bf16.mxu0 0
        %1098 = vmatpush1.bf16.msra.mxu0 0
        %1099 = vmatprep.subr.bf16.mxu0 0
        %1100 = vmatpush1.bf16.msra.mxu0 0
        %1101 = vmatprep.subr.bf16.mxu0 0
        %1102 = vmatpush1.bf16.msra.mxu0 0
        %1103 = vmatprep.subr.bf16.mxu0 0
        %1104 = vmatpush1.bf16.msra.mxu0 0
        %1105 = vmatprep.subr.bf16.mxu0 0
        %1106 = vmatpush1.bf16.msra.mxu0 0
        %1107 = vmatprep.subr.bf16.mxu0 0
        %1108 = vmatpush1.bf16.msra.mxu0 0
        %1109 = vmatprep.subr.bf16.mxu0 0
        %1110 = vmatpush1.bf16.msra.mxu0 0
        %1111 = vmatprep.subr.bf16.mxu0 0
        %1112 = vmatpush1.bf16.msra.mxu0 0
        %1113 = vmatprep.subr.bf16.mxu0 0
        %1114 = vmatpush1.bf16.msra.mxu0 0
        %1115 = vmatprep.subr.bf16.mxu0 0
        %1116 = vmatpush1.bf16.msra.mxu0 0
        %1117 = vmatprep.subr.bf16.mxu0 0
        %1118 = vmatpush1.bf16.msra.mxu0 0
        %1119 = vmatprep.mubr.bf16.mxu0 0
        %1120 = vmatmul.mubr.bf16.gmra.mrb[0].mxu0 %v1082
        %v1121 = vpop.f32.mrb[0].mxu0
        %v1122 = vadd.f32 %v1076, %v1121
        %v1123 = vpop.f32.mrb[0].mxu0
        %v1124 = vpop.f32.mrb[0].mxu0
        %v1125 = vpop.f32.mrb[0].mxu0
        %1126 = vdwg.mxu0
        %1127 = vrot.lane.b32.xlu0 %v808, 112
        %v1128 = vpop.permute.xlu0 %1127
        %1129 = vrot.lane.b32.xlu0 %v809, 112
        %v1130 = vpop.permute.xlu0 %1129
        %v1132 = vsel %vm811, %v1128, 0
        %v1135 = vsel %vm811, %v1130, 0
        %1137 = vmatprep.subr.bf16.mxu0 0
        %1138 = vmatpush1.bf16.xpose.msra.mxu0 %v1135
        %1139 = vmatprep.subr.bf16.mxu0 0
        %1140 = vmatpush1.bf16.xpose.msra.mxu0 0
        %1141 = vmatprep.subr.bf16.mxu0 0
        %1142 = vmatpush1.bf16.xpose.msra.mxu0 0
        %1143 = vmatprep.subr.bf16.mxu0 0
        %1144 = vmatpush1.bf16.xpose.msra.mxu0 0
        %1145 = vmatprep.subr.bf16.mxu0 0
        %1146 = vmatpush1.bf16.xpose.msra.mxu0 0
        %1147 = vmatprep.subr.bf16.mxu0 0
        %1148 = vmatpush1.bf16.xpose.msra.mxu0 0
        %1149 = vmatprep.subr.bf16.mxu0 0
        %1150 = vmatpush1.bf16.xpose.msra.mxu0 0
        %1151 = vmatprep.subr.bf16.mxu0 0
        %1152 = vmatpush1.bf16.xpose.msra.mxu0 0
        %1153 = vmatprep.subr.bf16.mxu0 0
        %1154 = vmatpush1.bf16.xpose.msra.mxu0 0
        %1155 = vmatprep.subr.bf16.mxu0 0
        %1156 = vmatpush1.bf16.xpose.msra.mxu0 0
        %1157 = vmatprep.subr.bf16.mxu0 0
        %1158 = vmatpush1.bf16.xpose.msra.mxu0 0
        %1159 = vmatprep.subr.bf16.mxu0 0
        %1160 = vmatpush1.bf16.xpose.msra.mxu0 0
        %1161 = vmatprep.subr.bf16.mxu0 0
        %1162 = vmatpush1.bf16.xpose.msra.mxu0 0
        %1163 = vmatprep.subr.bf16.mxu0 0
        %1164 = vmatpush1.bf16.xpose.msra.mxu0 0
        %1165 = vmatprep.subr.bf16.mxu0 0
        %1166 = vmatpush1.bf16.xpose.msra.mxu0 0
        %1167 = vmatprep.subr.bf16.mxu0 0
        %1168 = vmatpush1.bf16.xpose.msra.mxu0 0
        %1169 = vmatprep.mubr.bf16.mxu0 0
        %1170 = vmatmul.mubr.bf16.gmra.mrb[0].mxu0 %v1132
        %v1171 = vpop.f32.mrb[0].mxu0
        %v1172 = vadd.f32 0.0, %v1171
        %v1173 = vpop.f32.mrb[0].mxu0
        %v1174 = vpop.f32.mrb[0].mxu0
        %v1175 = vpop.f32.mrb[0].mxu0
        %1176 = vdwg.mxu0
        %v1177 = vsel %vm811, %v1172, -inf
        %1178 = vmax.xlane.f32.xlu0 %v1177
        %v1179 = vpop.xlane.xlu0 %1178
        %v1180 = vsub.f32 %v1172, %v1179
        %v1181 = vmul.f32 %v1180, 1.442695
        %v1182 = vpow.pop %v1181
        %v1183 = vsel %vm811, %v1182, 0.0
        %1184 = vadd.xlane.f32.xlu0 %v1183
        %v1185 = vpop.xlane.xlu0 %1184
        %v1186 = vrcp.pop %v1185
        %v1187 = vmul.f32 %v1182, %v1186
        %v1188 = vpack.c.bf16 %v1187, %v1187
        %1189 = vrot.lane.b32.xlu0 %v810, 112
        %v1190 = vpop.permute.xlu0 %1189
        %v1192 = vsel %vm811, %v1188, 0
        %v1195 = vsel %vm873, %v1190, 0
        %1197 = vmatprep.subr.bf16.mxu0 0
        %1198 = vmatpush1.bf16.msra.mxu0 %v1195
        %1199 = vmatprep.subr.bf16.mxu0 0
        %1200 = vmatpush1.bf16.msra.mxu0 0
        %1201 = vmatprep.subr.bf16.mxu0 0
        %1202 = vmatpush1.bf16.msra.mxu0 0
        %1203 = vmatprep.subr.bf16.mxu0 0
        %1204 = vmatpush1.bf16.msra.mxu0 0
        %1205 = vmatprep.subr.bf16.mxu0 0
        %1206 = vmatpush1.bf16.msra.mxu0 0
        %1207 = vmatprep.subr.bf16.mxu0 0
        %1208 = vmatpush1.bf16.msra.mxu0 0
        %1209 = vmatprep.subr.bf16.mxu0 0
        %1210 = vmatpush1.bf16.msra.mxu0 0
        %1211 = vmatprep.subr.bf16.mxu0 0
        %1212 = vmatpush1.bf16.msra.mxu0 0
        %1213 = vmatprep.subr.bf16.mxu0 0
        %1214 = vmatpush1.bf16.msra.mxu0 0
        %1215 = vmatprep.subr.bf16.mxu0 0
        %1216 = vmatpush1.bf16.msra.mxu0 0
        %1217 = vmatprep.subr.bf16.mxu0 0
        %1218 = vmatpush1.bf16.msra.mxu0 0
        %1219 = vmatprep.subr.bf16.mxu0 0
        %1220 = vmatpush1.bf16.msra.mxu0 0
        %1221 = vmatprep.subr.bf16.mxu0 0
        %1222 = vmatpush1.bf16.msra.mxu0 0
        %1223 = vmatprep.subr.bf16.mxu0 0
        %1224 = vmatpush1.bf16.msra.mxu0 0
        %1225 = vmatprep.subr.bf16.mxu0 0
        %1226 = vmatpush1.bf16.msra.mxu0 0
        %1227 = vmatprep.subr.bf16.mxu0 0
        %1228 = vmatpush1.bf16.msra.mxu0 0
        %1229 = vmatprep.mubr.bf16.mxu0 0
        %1230 = vmatmul.mubr.bf16.gmra.mrb[0].mxu0 %v1192
        %v1231 = vpop.f32.mrb[0].mxu0
        %v1232 = vadd.f32 0.0, %v1231
        %v1233 = vpop.f32.mrb[0].mxu0
        %v1234 = vpop.f32.mrb[0].mxu0
        %v1235 = vpop.f32.mrb[0].mxu0
        %1236 = vdwg.mxu0
        %v1237 = vpack.c.bf16 %v1232, %v1232
        %s1238 = scalar_lea.vmem %s9, 8
        %v1239 = vld [vmem:[%s1238] sm:$0xf]
        %v1241 = vsel %vm811, %v1237, 0
        %v1244 = vsel %vm873, %v1239, 0
        %1246 = vmatprep.subr.bf16.mxu0 0
        %1247 = vmatpush1.bf16.msra.mxu0 %v1244
        %1248 = vmatprep.subr.bf16.mxu0 0
        %1249 = vmatpush1.bf16.msra.mxu0 0
        %1250 = vmatprep.subr.bf16.mxu0 0
        %1251 = vmatpush1.bf16.msra.mxu0 0
        %1252 = vmatprep.subr.bf16.mxu0 0
        %1253 = vmatpush1.bf16.msra.mxu0 0
        %1254 = vmatprep.subr.bf16.mxu0 0
        %1255 = vmatpush1.bf16.msra.mxu0 0
        %1256 = vmatprep.subr.bf16.mxu0 0
        %1257 = vmatpush1.bf16.msra.mxu0 0
        %1258 = vmatprep.subr.bf16.mxu0 0
        %1259 = vmatpush1.bf16.msra.mxu0 0
        %1260 = vmatprep.subr.bf16.mxu0 0
        %1261 = vmatpush1.bf16.msra.mxu0 0
        %1262 = vmatprep.subr.bf16.mxu0 0
        %1263 = vmatpush1.bf16.msra.mxu0 0
        %1264 = vmatprep.subr.bf16.mxu0 0
        %1265 = vmatpush1.bf16.msra.mxu0 0
        %1266 = vmatprep.subr.bf16.mxu0 0
        %1267 = vmatpush1.bf16.msra.mxu0 0
        %1268 = vmatprep.subr.bf16.mxu0 0
        %1269 = vmatpush1.bf16.msra.mxu0 0
        %1270 = vmatprep.subr.bf16.mxu0 0
        %1271 = vmatpush1.bf16.msra.mxu0 0
        %1272 = vmatprep.subr.bf16.mxu0 0
        %1273 = vmatpush1.bf16.msra.mxu0 0
        %1274 = vmatprep.subr.bf16.mxu0 0
        %1275 = vmatpush1.bf16.msra.mxu0 0
        %1276 = vmatprep.subr.bf16.mxu0 0
        %1277 = vmatpush1.bf16.msra.mxu0 0
        %1278 = vmatprep.mubr.bf16.mxu0 0
        %1279 = vmatmul.mubr.bf16.gmra.mrb[0].mxu0 %v1241
        %v1280 = vpop.f32.mrb[0].mxu0
        %v1281 = vadd.f32 0.0, %v1280
        %v1282 = vpop.f32.mrb[0].mxu0
        %v1283 = vpop.f32.mrb[0].mxu0
        %v1284 = vpop.f32.mrb[0].mxu0
        %1285 = vdwg.mxu0
        %v1286 = vadd.f32 %v1122, %v1281
        %1287 = vrot.lane.b32.xlu0 %v808, 104
        %v1288 = vpop.permute.xlu0 %1287
        %1289 = vrot.lane.b32.xlu0 %v809, 104
        %v1290 = vpop.permute.xlu0 %1289
        %v1292 = vsel %vm811, %v1288, 0
        %v1295 = vsel %vm811, %v1290, 0
        %1297 = vmatprep.subr.bf16.mxu0 0
        %1298 = vmatpush1.bf16.xpose.msra.mxu0 %v1295
        %1299 = vmatprep.subr.bf16.mxu0 0
        %1300 = vmatpush1.bf16.xpose.msra.mxu0 0
        %1301 = vmatprep.subr.bf16.mxu0 0
        %1302 = vmatpush1.bf16.xpose.msra.mxu0 0
        %1303 = vmatprep.subr.bf16.mxu0 0
        %1304 = vmatpush1.bf16.xpose.msra.mxu0 0
        %1305 = vmatprep.subr.bf16.mxu0 0
        %1306 = vmatpush1.bf16.xpose.msra.mxu0 0
        %1307 = vmatprep.subr.bf16.mxu0 0
        %1308 = vmatpush1.bf16.xpose.msra.mxu0 0
        %1309 = vmatprep.subr.bf16.mxu0 0
        %1310 = vmatpush1.bf16.xpose.msra.mxu0 0
        %1311 = vmatprep.subr.bf16.mxu0 0
        %1312 = vmatpush1.bf16.xpose.msra.mxu0 0
        %1313 = vmatprep.subr.bf16.mxu0 0
        %1314 = vmatpush1.bf16.xpose.msra.mxu0 0
        %1315 = vmatprep.subr.bf16.mxu0 0
        %1316 = vmatpush1.bf16.xpose.msra.mxu0 0
        %1317 = vmatprep.subr.bf16.mxu0 0
        %1318 = vmatpush1.bf16.xpose.msra.mxu0 0
        %1319 = vmatprep.subr.bf16.mxu0 0
        %1320 = vmatpush1.bf16.xpose.msra.mxu0 0
        %1321 = vmatprep.subr.bf16.mxu0 0
        %1322 = vmatpush1.bf16.xpose.msra.mxu0 0
        %1323 = vmatprep.subr.bf16.mxu0 0
        %1324 = vmatpush1.bf16.xpose.msra.mxu0 0
        %1325 = vmatprep.subr.bf16.mxu0 0
        %1326 = vmatpush1.bf16.xpose.msra.mxu0 0
        %1327 = vmatprep.subr.bf16.mxu0 0
        %1328 = vmatpush1.bf16.xpose.msra.mxu0 0
        %1329 = vmatprep.mubr.bf16.mxu0 0
        %1330 = vmatmul.mubr.bf16.gmra.mrb[0].mxu0 %v1292
        %v1331 = vpop.f32.mrb[0].mxu0
        %v1332 = vadd.f32 0.0, %v1331
        %v1333 = vpop.f32.mrb[0].mxu0
        %v1334 = vpop.f32.mrb[0].mxu0
        %v1335 = vpop.f32.mrb[0].mxu0
        %1336 = vdwg.mxu0
        %v1337 = vsel %vm811, %v1332, -inf
        %1338 = vmax.xlane.f32.xlu0 %v1337
        %v1339 = vpop.xlane.xlu0 %1338
        %v1340 = vsub.f32 %v1332, %v1339
        %v1341 = vmul.f32 %v1340, 1.442695
        %v1342 = vpow.pop %v1341
        %v1343 = vsel %vm811, %v1342, 0.0
        %1344 = vadd.xlane.f32.xlu0 %v1343
        %v1345 = vpop.xlane.xlu0 %1344
        %v1346 = vrcp.pop %v1345
        %v1347 = vmul.f32 %v1342, %v1346
        %v1348 = vpack.c.bf16 %v1347, %v1347
        %1349 = vrot.lane.b32.xlu0 %v810, 104
        %v1350 = vpop.permute.xlu0 %1349
        %v1352 = vsel %vm811, %v1348, 0
        %v1355 = vsel %vm873, %v1350, 0
        %1357 = vmatprep.subr.bf16.mxu0 0
        %1358 = vmatpush1.bf16.msra.mxu0 %v1355
        %1359 = vmatprep.subr.bf16.mxu0 0
        %1360 = vmatpush1.bf16.msra.mxu0 0
        %1361 = vmatprep.subr.bf16.mxu0 0
        %1362 = vmatpush1.bf16.msra.mxu0 0
        %1363 = vmatprep.subr.bf16.mxu0 0
        %1364 = vmatpush1.bf16.msra.mxu0 0
        %1365 = vmatprep.subr.bf16.mxu0 0
        %1366 = vmatpush1.bf16.msra.mxu0 0
        %1367 = vmatprep.subr.bf16.mxu0 0
        %1368 = vmatpush1.bf16.msra.mxu0 0
        %1369 = vmatprep.subr.bf16.mxu0 0
        %1370 = vmatpush1.bf16.msra.mxu0 0
        %1371 = vmatprep.subr.bf16.mxu0 0
        %1372 = vmatpush1.bf16.msra.mxu0 0
        %1373 = vmatprep.subr.bf16.mxu0 0
        %1374 = vmatpush1.bf16.msra.mxu0 0
        %1375 = vmatprep.subr.bf16.mxu0 0
        %1376 = vmatpush1.bf16.msra.mxu0 0
        %1377 = vmatprep.subr.bf16.mxu0 0
        %1378 = vmatpush1.bf16.msra.mxu0 0
        %1379 = vmatprep.subr.bf16.mxu0 0
        %1380 = vmatpush1.bf16.msra.mxu0 0
        %1381 = vmatprep.subr.bf16.mxu0 0
        %1382 = vmatpush1.bf16.msra.mxu0 0
        %1383 = vmatprep.subr.bf16.mxu0 0
        %1384 = vmatpush1.bf16.msra.mxu0 0
        %1385 = vmatprep.subr.bf16.mxu0 0
        %1386 = vmatpush1.bf16.msra.mxu0 0
        %1387 = vmatprep.subr.bf16.mxu0 0
        %1388 = vmatpush1.bf16.msra.mxu0 0
        %1389 = vmatprep.mubr.bf16.mxu0 0
        %1390 = vmatmul.mubr.bf16.gmra.mrb[0].mxu0 %v1352
        %v1391 = vpop.f32.mrb[0].mxu0
        %v1392 = vadd.f32 0.0, %v1391
        %v1393 = vpop.f32.mrb[0].mxu0
        %v1394 = vpop.f32.mrb[0].mxu0
        %v1395 = vpop.f32.mrb[0].mxu0
        %1396 = vdwg.mxu0
        %v1397 = vpack.c.bf16 %v1392, %v1392
        %s1398 = scalar_lea.vmem %s9, 12
        %v1399 = vld [vmem:[%s1398] sm:$0xf]
        %v1401 = vsel %vm811, %v1397, 0
        %v1404 = vsel %vm873, %v1399, 0
        %1406 = vmatprep.subr.bf16.mxu0 0
        %1407 = vmatpush1.bf16.msra.mxu0 %v1404
        %1408 = vmatprep.subr.bf16.mxu0 0
        %1409 = vmatpush1.bf16.msra.mxu0 0
        %1410 = vmatprep.subr.bf16.mxu0 0
        %1411 = vmatpush1.bf16.msra.mxu0 0
        %1412 = vmatprep.subr.bf16.mxu0 0
        %1413 = vmatpush1.bf16.msra.mxu0 0
        %1414 = vmatprep.subr.bf16.mxu0 0
        %1415 = vmatpush1.bf16.msra.mxu0 0
        %1416 = vmatprep.subr.bf16.mxu0 0
        %1417 = vmatpush1.bf16.msra.mxu0 0
        %1418 = vmatprep.subr.bf16.mxu0 0
        %1419 = vmatpush1.bf16.msra.mxu0 0
        %1420 = vmatprep.subr.bf16.mxu0 0
        %1421 = vmatpush1.bf16.msra.mxu0 0
        %1422 = vmatprep.subr.bf16.mxu0 0
        %1423 = vmatpush1.bf16.msra.mxu0 0
        %1424 = vmatprep.subr.bf16.mxu0 0
        %1425 = vmatpush1.bf16.msra.mxu0 0
        %1426 = vmatprep.subr.bf16.mxu0 0
        %1427 = vmatpush1.bf16.msra.mxu0 0
        %1428 = vmatprep.subr.bf16.mxu0 0
        %1429 = vmatpush1.bf16.msra.mxu0 0
        %1430 = vmatprep.subr.bf16.mxu0 0
        %1431 = vmatpush1.bf16.msra.mxu0 0
        %1432 = vmatprep.subr.bf16.mxu0 0
        %1433 = vmatpush1.bf16.msra.mxu0 0
        %1434 = vmatprep.subr.bf16.mxu0 0
        %1435 = vmatpush1.bf16.msra.mxu0 0
        %1436 = vmatprep.subr.bf16.mxu0 0
        %1437 = vmatpush1.bf16.msra.mxu0 0
        %1438 = vmatprep.mubr.bf16.mxu0 0
        %1439 = vmatmul.mubr.bf16.gmra.mrb[0].mxu0 %v1401
        %v1440 = vpop.f32.mrb[0].mxu0
        %v1441 = vadd.f32 0.0, %v1440
        %v1442 = vpop.f32.mrb[0].mxu0
        %v1443 = vpop.f32.mrb[0].mxu0
        %v1444 = vpop.f32.mrb[0].mxu0
        %1445 = vdwg.mxu0
        %v1446 = vadd.f32 %v1286, %v1441
        %v1447 = vadd.f32 %v583, %v1446
        %v1448 = vld [vmem:[%s10] sm:$0x1]
        %v1450 = vlaneseq
        %v1451 = vshrl.u32 %v1450, 7
        %v1452 = vsub.s32 0, %v1451
        %v1453 = vrot.slane %v1448, %v1452
        %v1455 = vadd.f32 %v1447, %v1453
        %v1456 = vld [vmem:[%s11] sm:$0x1]
        %v1457 = vld [vmem:[%s12] sm:$0x1]
        %v1458 = vsel %vm586, %v1455, 0.0
        %1459 = vadd.xlane.f32.xlu0 %v1458
        %v1460 = vpop.xlane.xlu0 %1459
        %v1461 = vmul.f32 %v1460, %v590
        %v1462 = vsub.f32 %v1455, %v1461
        %v1463 = vmul.f32 %v1462, %v1462
        %v1464 = vsel %vm586, %v1463, 0.0
        %1465 = vadd.xlane.f32.xlu0 %v1464
        %v1466 = vpop.xlane.xlu0 %1465
        %v1467 = vmul.f32 %v1466, %v590
        %v1468 = vadd.f32 %v1467, 1e-06
        %v1469 = vrsqrt.pop %v1468
        %v1470 = vmul.f32 %v1462, %v1469
        %v1472 = vlaneseq
        %v1473 = vshrl.u32 %v1472, 7
        %v1474 = vsub.s32 0, %v1473
        %v1475 = vrot.slane %v1456, %v1474
        %v1477 = vmul.f32 %v1470, %v1475
        %v1479 = vlaneseq
        %v1480 = vshrl.u32 %v1479, 7
        %v1481 = vsub.s32 0, %v1480
        %v1482 = vrot.slane %v1457, %v1481
        %v1484 = vadd.f32 %v1477, %v1482
        %v1485 = vpack.c.bf16 %v1484, %v1484
        %v1486 = vld [vmem:[%s13] sm:$0xf]
        %v1487 = vld [vmem:[%s13 + $0x4] sm:$0xf]
        %v1488 = vld [vmem:[%s13 + $0x8] sm:$0xf]
        %v1489 = vld [vmem:[%s13 + $0xc] sm:$0xf]
        %v1490 = vld [vmem:[%s14] sm:$0x1]
        %v1492 = vlaneseq
        %v1493 = vshrl.u32 %v1492, 7
        %v1494 = vsub.s32 0, %v1493
        %v1495 = vrot.slane %v1490, %v1494
        %v1501 = vunpack.c.l.b16 %v1486
        %v1502 = vunpack.c.l.b16 %v1487
        %v1503 = vunpack.c.l.b16 %v1488
        %v1504 = vunpack.c.l.b16 %v1489
        %v1505 = vpack.c.b16 %v1502, %v1501
        %v1506 = vpack.c.b16 %v1504, %v1503
        %v1510 = vsel %vm586, %v1485, 0
        %1512 = vmatprep.subr.bf16.mxu0 0
        %1513 = vmatpush1.bf16.msra.mxu0 %v1505
        %1514 = vmatprep.subr.bf16.mxu0 0
        %1515 = vmatpush1.bf16.msra.mxu0 %v1506
        %1516 = vmatprep.subr.bf16.mxu0 0
        %1517 = vmatpush1.bf16.msra.mxu0 0
        %1518 = vmatprep.subr.bf16.mxu0 0
        %1519 = vmatpush1.bf16.msra.mxu0 0
        %1520 = vmatprep.subr.bf16.mxu0 0
        %1521 = vmatpush1.bf16.msra.mxu0 0
        %1522 = vmatprep.subr.bf16.mxu0 0
        %1523 = vmatpush1.bf16.msra.mxu0 0
        %1524 = vmatprep.subr.bf16.mxu0 0
        %1525 = vmatpush1.bf16.msra.mxu0 0
        %1526 = vmatprep.subr.bf16.mxu0 0
        %1527 = vmatpush1.bf16.msra.mxu0 0
        %1528 = vmatprep.subr.bf16.mxu0 0
        %1529 = vmatpush1.bf16.msra.mxu0 0
        %1530 = vmatprep.subr.bf16.mxu0 0
        %1531 = vmatpush1.bf16.msra.mxu0 0
        %1532 = vmatprep.subr.bf16.mxu0 0
        %1533 = vmatpush1.bf16.msra.mxu0 0
        %1534 = vmatprep.subr.bf16.mxu0 0
        %1535 = vmatpush1.bf16.msra.mxu0 0
        %1536 = vmatprep.subr.bf16.mxu0 0
        %1537 = vmatpush1.bf16.msra.mxu0 0
        %1538 = vmatprep.subr.bf16.mxu0 0
        %1539 = vmatpush1.bf16.msra.mxu0 0
        %1540 = vmatprep.subr.bf16.mxu0 0
        %1541 = vmatpush1.bf16.msra.mxu0 0
        %1542 = vmatprep.subr.bf16.mxu0 0
        %1543 = vmatpush1.bf16.msra.mxu0 0
        %1544 = vmatprep.mubr.bf16.mxu0 0
        %1545 = vmatmul.mubr.bf16.gmra.mrb[0].mxu0 %v1510
        %v1546 = vpop.f32.mrb[0].mxu0
        %v1547 = vadd.f32 %v1495, %v1546
        %v1548 = vpop.f32.mrb[0].mxu0
        %v1549 = vpop.f32.mrb[0].mxu0
        %v1550 = vpop.f32.mrb[0].mxu0
        %1551 = vdwg.mxu0
        %v1552 = vmul.f32 %v1547, 0.5
        %v1553 = vmul.f32 %v1547, 0.70710677
        %v1554 = vmax.f32 %v1553, -4.0
        %v1555 = vmin.f32 %v1554, 4.0
        %v1556 = vmul.f32 %v1555, %v1555
        %v1557 = vmul.f32 %v1556, 0.00022905065
        %v1558 = vadd.f32 %v1557, 0.003408291
        %v1559 = vmul.f32 %v1558, %v1556
        %v1560 = vadd.f32 %v1559, 0.050955694
        %v1561 = vmul.f32 %v1560, %v1556
        %v1562 = vadd.f32 %v1561, 0.18520832
        %v1563 = vmul.f32 %v1562, %v1556
        %v1564 = vadd.f32 %v1563, 1.1283791
        %v1565 = vmul.f32 %v1555, %v1564
        %v1566 = vmul.f32 %v1556, -1.1791603e-07
        %v1567 = vadd.f32 %v1566, 2.3547966e-05
        %v1568 = vmul.f32 %v1567, %v1556
        %v1569 = vadd.f32 %v1568, 0.0010179626
        %v1570 = vmul.f32 %v1569, %v1556
        %v1571 = vadd.f32 %v1570, 0.01407047
        %v1572 = vmul.f32 %v1571, %v1556
        %v1573 = vadd.f32 %v1572, 0.11098505
        %v1574 = vmul.f32 %v1573, %v1556
        %v1575 = vadd.f32 %v1574, 0.49746925
        %v1576 = vmul.f32 %v1575, %v1556
        %v1577 = vadd.f32 %v1576, 1.0
        %v1578 = vrcp.pop %v1577
        %v1579 = vmul.f32 %v1565, %v1578
        %v1580 = vadd.f32 %v1579, 1.0
        %v1581 = vmul.f32 %v1552, %v1580
        %v1582 = vpack.c.bf16 %v1581, %v1581
        %v1583 = vld [vmem:[%s15] sm:$0xf]
        %v1584 = vld [vmem:[%s15 + $0x4] sm:$0xf]
        %v1585 = vld [vmem:[%s15 + $0x8] sm:$0xf]
        %v1586 = vld [vmem:[%s15 + $0xc] sm:$0xf]
        %v1587 = vld [vmem:[%s15 + $0x10] sm:$0xf]
        %v1588 = vld [vmem:[%s15 + $0x14] sm:$0xf]
        %v1589 = vld [vmem:[%s15 + $0x18] sm:$0xf]
        %v1590 = vld [vmem:[%s15 + $0x1c] sm:$0xf]
        %v1591 = vld [vmem:[%s15 + $0x20] sm:$0xf]
        %v1592 = vld [vmem:[%s15 + $0x24] sm:$0xf]
        %v1593 = vld [vmem:[%s15 + $0x28] sm:$0xf]
        %v1594 = vld [vmem:[%s15 + $0x2c] sm:$0xf]
        %v1595 = vld [vmem:[%s15 + $0x30] sm:$0xf]
        %v1596 = vld [vmem:[%s15 + $0x34] sm:$0xf]
        %v1597 = vld [vmem:[%s15 + $0x38] sm:$0xf]
        %v1598 = vld [vmem:[%s15 + $0x3c] sm:$0xf]
        %v1599 = vld [vmem:[%s16] sm:$0x1]
        %v1601 = vlaneseq
        %v1602 = vshrl.u32 %v1601, 7
        %v1603 = vsub.s32 0, %v1602
        %v1604 = vrot.slane %v1599, %v1603
        %v1622 = vunpack.c.l.b16 %v1583
        %v1623 = vunpack.c.l.b16 %v1584
        %v1624 = vunpack.c.l.b16 %v1585
        %v1625 = vunpack.c.l.b16 %v1586
        %v1626 = vunpack.c.l.b16 %v1587
        %v1627 = vunpack.c.l.b16 %v1588
        %v1628 = vunpack.c.l.b16 %v1589
        %v1629 = vunpack.c.l.b16 %v1590
        %v1630 = vunpack.c.l.b16 %v1591
        %v1631 = vunpack.c.l.b16 %v1592
        %v1632 = vunpack.c.l.b16 %v1593
        %v1633 = vunpack.c.l.b16 %v1594
        %v1634 = vunpack.c.l.b16 %v1595
        %v1635 = vunpack.c.l.b16 %v1596
        %v1636 = vunpack.c.l.b16 %v1597
        %v1637 = vunpack.c.l.b16 %v1598
        %v1638 = vpack.c.b16 %v1623, %v1622
        %v1639 = vpack.c.b16 %v1625, %v1624
        %v1640 = vpack.c.b16 %v1627, %v1626
        %v1641 = vpack.c.b16 %v1629, %v1628
        %v1642 = vpack.c.b16 %v1631, %v1630
        %v1643 = vpack.c.b16 %v1633, %v1632
        %v1644 = vpack.c.b16 %v1635, %v1634
        %v1645 = vpack.c.b16 %v1637, %v1636
        %1654 = vmatprep.subr.bf16.mxu0 0
        %1655 = vmatpush1.bf16.msra.mxu0 %v1638
        %1656 = vmatprep.subr.bf16.mxu0 0
        %1657 = vmatpush1.bf16.msra.mxu0 %v1639
        %1658 = vmatprep.subr.bf16.mxu0 0
        %1659 = vmatpush1.bf16.msra.mxu0 %v1640
        %1660 = vmatprep.subr.bf16.mxu0 0
        %1661 = vmatpush1.bf16.msra.mxu0 %v1641
        %1662 = vmatprep.subr.bf16.mxu0 0
        %1663 = vmatpush1.bf16.msra.mxu0 %v1642
        %1664 = vmatprep.subr.bf16.mxu0 0
        %1665 = vmatpush1.bf16.msra.mxu0 %v1643
        %1666 = vmatprep.subr.bf16.mxu0 0
        %1667 = vmatpush1.bf16.msra.mxu0 %v1644
        %1668 = vmatprep.subr.bf16.mxu0 0
        %1669 = vmatpush1.bf16.msra.mxu0 %v1645
        %1670 = vmatprep.subr.bf16.mxu0 0
        %1671 = vmatpush1.bf16.msra.mxu0 0
        %1672 = vmatprep.subr.bf16.mxu0 0
        %1673 = vmatpush1.bf16.msra.mxu0 0
        %1674 = vmatprep.subr.bf16.mxu0 0
        %1675 = vmatpush1.bf16.msra.mxu0 0
        %1676 = vmatprep.subr.bf16.mxu0 0
        %1677 = vmatpush1.bf16.msra.mxu0 0
        %1678 = vmatprep.subr.bf16.mxu0 0
        %1679 = vmatpush1.bf16.msra.mxu0 0
        %1680 = vmatprep.subr.bf16.mxu0 0
        %1681 = vmatpush1.bf16.msra.mxu0 0
        %1682 = vmatprep.subr.bf16.mxu0 0
        %1683 = vmatpush1.bf16.msra.mxu0 0
        %1684 = vmatprep.subr.bf16.mxu0 0
        %1685 = vmatpush1.bf16.msra.mxu0 0
        %1686 = vmatprep.mubr.bf16.mxu0 0
        %1687 = vmatmul.mubr.bf16.gmra.mrb[0].mxu0 %v1582
        %v1688 = vpop.f32.mrb[0].mxu0
        %v1689 = vadd.f32 %v1604, %v1688
        %v1690 = vpop.f32.mrb[0].mxu0
        %v1691 = vpop.f32.mrb[0].mxu0
        %v1692 = vpop.f32.mrb[0].mxu0
        %1693 = vdwg.mxu0
        %v1694 = vadd.f32 %v1455, %v1689
        %1695 = vst.msk [vmem:[%s577] sm:$0xff] %vm586, %v1694
        %s1696 = sand.u32 %s403, 1
        %s1697 = scalar_lea.sflag [#allocation4], %s1696
        %s1698 = sand.u32 %s403, 1
        %s1699 = smul.addr %s1698, 8
        %s1700 = scalar_lea.vmem [#allocation8], %s1699
        // Predicated region
        $region101: #{tpu_custom_call.1} parent=87 // pred_check
          %p1701 = pneg %p413
        $region102: #{tpu_custom_call.1} parent=87 // pred_check_branch
          %1703 = sbr.rel (%p1701) target = $region104
        $region103: #{tpu_custom_call.1} parent=87 // pred_region
          %s1705 = ssub.s32 128, 128
          %1706 = vsyncadd %s1697, %s1705
          %s1707 = smul.addr %s33, 128
          %s1708 = scalar_lea.hbm %s17, %s1707
          %s1710 = sshll.u32 %s1700, 4
          %s1711 = int_to_ptr.vmem [resolvable:$true] %s1710
          %1713 = dma.vmem_to_hbm [thread:$0]  %s1711, 128, %s1708, %s1697
        $region104: #{tpu_custom_call.1} parent=87 // pred_fallthru
          _
      $region88: #{tpu_custom_call.1} parent=5 // pred_fallthru
        _
      %p1714 = scmp.le.s32.totalorder 2, %s28
      // Predicated region
      $region105: #{tpu_custom_call.1} parent=5 // pred_check
        %p1715 = pneg %p1714
      $region106: #{tpu_custom_call.1} parent=5 // pred_check_branch
        %1717 = sbr.rel (%p1715) target = $region108
      $region107: #{tpu_custom_call.1} parent=5 // pred_region
        %s1718 = ssub.s32 %s28, 2
        // Predicated region
        $region109: #{tpu_custom_call.1} parent=107 // pred_check
          %p1719 = pneg %p419
        $region110: #{tpu_custom_call.1} parent=107 // pred_check_branch
          %1721 = sbr.rel (%p1719) target = $region112
        $region111: #{tpu_custom_call.1} parent=107 // pred_region
          %s1722 = sand.u32 %s404, 1
          %s1723 = scalar_lea.sflag [#allocation4], %s1722
          %s1724 = sand.u32 %s404, 1
          %s1725 = smul.addr %s1724, 8
          %s1726 = scalar_lea.vmem [#allocation8], %s1725
          %1727 = dma.done %s1723, 128
        $region112: #{tpu_custom_call.1} parent=107 // pred_fallthru
          _
      $region108: #{tpu_custom_call.1} parent=5 // pred_fallthru
        _
    $region6: #{tpu_custom_call.1} parent=1 // loop_footer
      %s32 = sadd.s32 1, %s28
    $region7: #{tpu_custom_call.1} parent=1 // loop_footer_branch
      %27 = sbr.rel target = $region3
    $region8: #{tpu_custom_call.1} parent=1 // loop_exit
      _
    %1728 = vsyncpa [#allocation3], 1
    %s1729 = scalar_lea.sflag [#allocation3], 1
    %1730 = vsyncpa %s1729, 1
    %1731 = vsyncpa [#allocation6], 1
    %1732 = vsyncpa [#allocation4], 1
    %s1733 = scalar_lea.sflag [#allocation4], 1
    %1734 = vsyncpa %s1733, 1

</llo_original>
